<compile_context>
chip_gen: v7x
topology: tpu7x:2x2x1
jax: 0.10.0
libtpu: 0.0.40
codegen_flags: <defaults>
</compile_context>

<pallas_src>
import jax
import jax.numpy as jnp
from jax.experimental import pallas as pl
from jax.experimental.pallas import tpu as pltpu


def fused_kernel(x_ref, s_ref, w_ref, gamma_ref, beta_ref, o_ref):
    # sigmoid gate on the EUP, shape (1, Cin)
    gate = jax.nn.sigmoid(s_ref[...])

    # Fold the per-input-channel gate into the conv weight's columns
    # (sublane-direction broadcast, cheap): (Cout, Cin) * (1, Cin).
    # Mathematically identical to gating x (associativity of the product).
    wg = w_ref[...] * gate

    # 1x1 conv as a single MXU matmul in channels-on-rows layout:
    #   (Cout, Cin) @ (Cin, M) -> (Cout, M)
    y = jnp.dot(wg, x_ref[...], preferred_element_type=jnp.float32)

    # BatchNorm2d training-mode statistics: biased variance over the
    # M = N*H*W axis (axis=1 here, lane-axis reduction -> XLU), eps = 1e-5.
    inv_m = 1.0 / y.shape[1]
    mean = jnp.sum(y, axis=1, keepdims=True) * inv_m            # (Cout, 1)
    diff = y - mean
    var = jnp.sum(diff * diff, axis=1, keepdims=True) * inv_m   # (Cout, 1)

    # Fold the BN affine into one per-channel scale/shift -> FMA epilogue.
    scale = gamma_ref[...] * jax.lax.rsqrt(var + 1e-5)          # (Cout, 1)
    shift = beta_ref[...] - mean * scale                        # (Cout, 1)
    o_ref[...] = y * scale + shift


def sigmoid_mul_conv1x1_bn(x_nchw, s_nc11, w_oi, gamma, beta):
    """x_nchw: (1, Cin, H, W); s_nc11: (1, Cin, 1, 1); w_oi: (Cout, Cin)."""
    N, Cin, H, W = x_nchw.shape
    Cout = w_oi.shape[0]
    assert N == 1, "kernel assumes batch size 1 (as in the reference module)"
    M = N * H * W

    # All of the reshapes below are contiguous (pure metadata, no XLA copies).
    x2d = x_nchw.reshape(Cin, M)          # (Cin, M)
    s2d = s_nc11.reshape(1, Cin)          # (1, Cin)
    g2d = gamma.reshape(Cout, 1)          # (Cout, 1)
    b2d = beta.reshape(Cout, 1)           # (Cout, 1)
    # conv weight stays in its native (Cout, Cin) layout.

    vmem = pl.BlockSpec(memory_space=pltpu.MemorySpace.VMEM)
    flops = 2 * M * Cin * Cout
    bytes_accessed = 4 * (Cin * M + Cin + Cout * Cin + 2 * Cout + Cout * M)

    y2d = pl.pallas_call(
        fused_kernel,
        out_shape=jax.ShapeDtypeStruct((Cout, M), jnp.float32),
        in_specs=[vmem, vmem, vmem, vmem, vmem],
        out_specs=vmem,
        cost_estimate=pl.CostEstimate(
            flops=flops, transcendentals=Cin, bytes_accessed=bytes_accessed),
    )(x2d, s2d, w_oi, g2d, b2d)

    # (Cout, M) -> (1, Cout, H, W): contiguous reshape, free for N == 1.
    return y2d.reshape(N, Cout, H, W)


if __name__ == "__main__":
    key = jax.random.PRNGKey(0)
    k_x, k_s, k_w = jax.random.split(key, 3)

    # Shapes implied by the module's forward.
    N, Cin, H, W = 1, 816, 14, 14
    Cout = 136

    x233 = jax.random.normal(k_x, (N, Cin, H, W), dtype=jnp.float32)
    x237 = jax.random.normal(k_s, (N, Cin, 1, 1), dtype=jnp.float32)

    # Conv2d(816, 136, 1, bias=False) weight (kaiming-like uniform range);
    # BatchNorm2d affine params use PyTorch defaults (weight=1, bias=0).
    bound = (1.0 / Cin) ** 0.5
    w = jax.random.uniform(k_w, (Cout, Cin), dtype=jnp.float32,
                           minval=-bound, maxval=bound)
    gamma = jnp.ones((Cout,), dtype=jnp.float32)
    beta = jnp.zeros((Cout,), dtype=jnp.float32)

    out = sigmoid_mul_conv1x1_bn(x233, x237, w, gamma, beta)
    out = jax.block_until_ready(out)
    assert out.shape == (N, Cout, H, W), out.shape

    # Pure-JAX reference (same math as the PyTorch module's forward output).
    # TODO(synk): running_mean/running_var buffer updates of BatchNorm2d are a
    # stateful side effect, not part of the returned tensor; not implemented.
    xs_ref = jax.nn.sigmoid(x237) * x233
    y_ref = jnp.einsum('nchw,oc->nohw', xs_ref, w)
    mean_ref = jnp.mean(y_ref, axis=(0, 2, 3), keepdims=True)
    var_ref = jnp.mean((y_ref - mean_ref) ** 2, axis=(0, 2, 3), keepdims=True)
    bn_ref = (y_ref - mean_ref) * jax.lax.rsqrt(var_ref + 1e-5)
    bn_ref = bn_ref * gamma.reshape(1, Cout, 1, 1) + beta.reshape(1, Cout, 1, 1)
    assert jnp.allclose(out, bn_ref, atol=2e-4, rtol=2e-4)

    print("KERNEL_OK")
</pallas_src>

<mosaic_0001>
module attributes {stable_mosaic.version = 11 : i64} {
  func.func @fused_kernel(%arg0: memref<816x196xf32, #tpu.memory_space<vmem>>, %arg1: memref<1x816xf32, #tpu.memory_space<vmem>>, %arg2: memref<136x816xf32, #tpu.memory_space<vmem>>, %arg3: memref<136x1xf32, #tpu.memory_space<vmem>>, %arg4: memref<136x1xf32, #tpu.memory_space<vmem>>, %arg5: memref<136x196xf32, #tpu.memory_space<vmem>>) attributes {dimension_semantics = [], scalar_prefetch = 0 : i64, scratch_operands = 0 : i64, tpu.core_type = #tpu.core_type<tc>} {
    %c0 = arith.constant 0 : index
    %c0_0 = arith.constant 0 : index
    %0 = vector.load %arg1[%c0, %c0_0] : memref<1x816xf32, #tpu.memory_space<vmem>>, vector<1x816xf32>
    %1 = arith.negf %0 : vector<1x816xf32>
    %2 = math.exp %1 : vector<1x816xf32>
    %cst = arith.constant 1.000000e+00 : f32
    %3 = vector.broadcast %cst : f32 to vector<1x816xf32>
    %4 = arith.addf %3, %2 : vector<1x816xf32>
    %5 = arith.divf %3, %4 : vector<1x816xf32>
    %c0_1 = arith.constant 0 : index
    %c0_2 = arith.constant 0 : index
    %6 = vector.load %arg2[%c0_1, %c0_2] : memref<136x816xf32, #tpu.memory_space<vmem>>, vector<136x816xf32>
    %7 = vector.broadcast %5 : vector<1x816xf32> to vector<136x816xf32>
    %8 = arith.mulf %6, %7 : vector<136x816xf32>
    %c0_3 = arith.constant 0 : index
    %c0_4 = arith.constant 0 : index
    %9 = vector.load %arg0[%c0_3, %c0_4] : memref<816x196xf32, #tpu.memory_space<vmem>>, vector<816x196xf32>
    %cst_5 = arith.constant dense<0.000000e+00> : vector<136x196xf32>
    %10 = tpu.matmul %8, %9, %cst_5 {dimension_numbers = #tpu.dot_dimension_numbers<[1], [0], [0], [1], [0, 0, 1, 1], [], []>} : vector<136x816xf32>, vector<816x196xf32>, vector<136x196xf32> -> vector<136x196xf32>
    %cst_6 = arith.constant dense<0.000000e+00> : vector<136xf32>
    %11 = vector.multi_reduction <add>, %10, %cst_6 [1] : vector<136x196xf32> to vector<136xf32>
    %12 = vector.shape_cast %11 : vector<136xf32> to vector<136x1xf32>
    %cst_7 = arith.constant 0.00510204071 : f32
    %13 = vector.broadcast %cst_7 : f32 to vector<136x1xf32>
    %14 = arith.mulf %12, %13 : vector<136x1xf32>
    %15 = vector.broadcast %14 : vector<136x1xf32> to vector<136x196xf32>
    %16 = arith.subf %10, %15 : vector<136x196xf32>
    %17 = arith.mulf %16, %16 : vector<136x196xf32>
    %cst_8 = arith.constant dense<0.000000e+00> : vector<136xf32>
    %18 = vector.multi_reduction <add>, %17, %cst_8 [1] : vector<136x196xf32> to vector<136xf32>
    %19 = vector.shape_cast %18 : vector<136xf32> to vector<136x1xf32>
    %cst_9 = arith.constant 0.00510204071 : f32
    %20 = vector.broadcast %cst_9 : f32 to vector<136x1xf32>
    %21 = arith.mulf %19, %20 : vector<136x1xf32>
    %c0_10 = arith.constant 0 : index
    %c0_11 = arith.constant 0 : index
    %22 = vector.load %arg3[%c0_10, %c0_11] : memref<136x1xf32, #tpu.memory_space<vmem>>, vector<136x1xf32>
    %cst_12 = arith.constant 9.99999974E-6 : f32
    %23 = vector.broadcast %cst_12 : f32 to vector<136x1xf32>
    %24 = arith.addf %21, %23 : vector<136x1xf32>
    %25 = math.rsqrt %24 : vector<136x1xf32>
    %26 = arith.mulf %22, %25 : vector<136x1xf32>
    %c0_13 = arith.constant 0 : index
    %c0_14 = arith.constant 0 : index
    %27 = vector.load %arg4[%c0_13, %c0_14] : memref<136x1xf32, #tpu.memory_space<vmem>>, vector<136x1xf32>
    %28 = arith.mulf %14, %26 : vector<136x1xf32>
    %29 = arith.subf %27, %28 : vector<136x1xf32>
    %30 = vector.broadcast %26 : vector<136x1xf32> to vector<136x196xf32>
    %31 = arith.mulf %10, %30 : vector<136x196xf32>
    %32 = vector.broadcast %29 : vector<136x1xf32> to vector<136x196xf32>
    %33 = arith.addf %31, %32 : vector<136x196xf32>
    %c0_15 = arith.constant 0 : index
    %c0_16 = arith.constant 0 : index
    %34 = vector.load %arg5[%c0_15, %c0_16] : memref<136x196xf32, #tpu.memory_space<vmem>>, vector<136x196xf32>
    tpu.vector_store %arg5[%c0_15, %c0_16], %33 {strides = array<i32>} : memref<136x196xf32, #tpu.memory_space<vmem>>, vector<136x196xf32>,
    return
  }
}

</mosaic_0001>

<llo_original>
// kernel: tpu_custom_call.1
$region0: #{tpu_custom_call.1}
  #allocation0 [shape = 'u32[]', space=smem, size = 0x4, offset = 0x4, fixed_abs, tag = 'smem constant byte address 0x4 - core index']
  #allocation1 [shape = 'u32[144,128]{1,0:T(1,128)}', space=vmem, size = 0x12000, scoped, tag = 'internal scratch']
  %s0 = inlined_call_operand.vmem [shape: f32[816,196], index: 0, kind: input, shape index: {}]
  %s1 = inlined_call_operand.vmem [shape: f32[1,816], index: 1, kind: input, shape index: {}]
  %s2 = inlined_call_operand.vmem [shape: f32[136,816], index: 2, kind: input, shape index: {}]
  %s3 = inlined_call_operand.vmem [shape: f32[136,1], index: 3, kind: input, shape index: {}]
  %s4 = inlined_call_operand.vmem [shape: f32[136,1], index: 4, kind: input, shape index: {}]
  %s5 = inlined_call_operand.hbm [shape: f32[136,196], index: 5, kind: output, shape index: {}]
  %s6 = sld [smem:[#allocation0]]
  $region30: #{tpu_custom_call.1} parent=0
    _
  %s8 = ssub.s32 1, %s6
  %s9 = scalar_select 0, %s8, %s6
  $region1: #{tpu_custom_call.1} parent=0
    #allocation2 [shape = 'u8[139264]{0}', space=vmem, size = 0x22000, scoped, tag = 'output window, operand 0, single buffered']
    #allocation3 [shape = 's32[1]{0}', space=sflag, size = 0x4, scoped, tag = 'scoped memory for tpu_custom_call.1']
    %10 = vsyncpa [#allocation3], 0
    // Predicated region
    $region2: #{tpu_custom_call.1} parent=1 // pred_check
      _
    $region3: #{tpu_custom_call.1} parent=1 // pred_check_branch
      %12 = sbr.rel (0) target = $region5
    $region4: #{tpu_custom_call.1} parent=1 // pred_region
      _
    $region5: #{tpu_custom_call.1} parent=1 // pred_fallthru
      _
    // Predicated region
    $region6: #{tpu_custom_call.1} parent=1 // pred_check
      _
    $region7: #{tpu_custom_call.1} parent=1 // pred_check_branch
      %14 = sbr.rel (0) target = $region9
    $region8: #{tpu_custom_call.1} parent=1 // pred_region
      _
    $region9: #{tpu_custom_call.1} parent=1 // pred_fallthru
      _
    // Predicated region
    $region10: #{tpu_custom_call.1} parent=1 // pred_check
      _
    $region11: #{tpu_custom_call.1} parent=1 // pred_check_branch
      %16 = sbr.rel (0) target = $region13
    $region12: #{tpu_custom_call.1} parent=1 // pred_region
      _
    $region13: #{tpu_custom_call.1} parent=1 // pred_fallthru
      _
    // Predicated region
    $region14: #{tpu_custom_call.1} parent=1 // pred_check
      _
    $region15: #{tpu_custom_call.1} parent=1 // pred_check_branch
      %18 = sbr.rel (0) target = $region17
    $region16: #{tpu_custom_call.1} parent=1 // pred_region
      _
    $region17: #{tpu_custom_call.1} parent=1 // pred_fallthru
      _
    // Predicated region
    $region18: #{tpu_custom_call.1} parent=1 // pred_check
      _
    $region19: #{tpu_custom_call.1} parent=1 // pred_check_branch
      %20 = sbr.rel (0) target = $region21
    $region20: #{tpu_custom_call.1} parent=1 // pred_region
      _
    $region21: #{tpu_custom_call.1} parent=1 // pred_fallthru
      _
    %v21 = vld [vmem:[%s1] sm:$0x7f]
    %v22 = vxor.u32 %v21, 2147483648
    %v23 = vmul.f32 %v22, 1.442695
    %v24 = vpow.pop %v23
    %v25 = vadd.f32 %v24, 1.0
    %v26 = vrcp.pop %v25
    %v27 = vmul.f32 1.0, %v26
    %v28 = vld [vmem:[%s2] sm:$0xff]
    %v29 = vld [vmem:[%s2 + $0x8] sm:$0xff]
    %v30 = vld [vmem:[%s2 + $0x10] sm:$0xff]
    %v31 = vld [vmem:[%s2 + $0x18] sm:$0xff]
    %v32 = vld [vmem:[%s2 + $0x20] sm:$0xff]
    %v33 = vld [vmem:[%s2 + $0x28] sm:$0xff]
    %v34 = vld [vmem:[%s2 + $0x30] sm:$0xff]
    %v35 = vld [vmem:[%s2 + $0x38] sm:$0xff]
    %v36 = vld [vmem:[%s2 + $0x40] sm:$0xff]
    %v37 = vld [vmem:[%s2 + $0x48] sm:$0xff]
    %v38 = vld [vmem:[%s2 + $0x50] sm:$0xff]
    %v39 = vld [vmem:[%s2 + $0x58] sm:$0xff]
    %v40 = vld [vmem:[%s2 + $0x60] sm:$0xff]
    %v41 = vld [vmem:[%s2 + $0x68] sm:$0xff]
    %v42 = vld [vmem:[%s2 + $0x70] sm:$0xff]
    %v43 = vld [vmem:[%s2 + $0x78] sm:$0xff]
    %v44 = vld [vmem:[%s2 + $0x80] sm:$0xff]
    %v45 = vld [vmem:[%s2 + $0x88] sm:$0xff]
    %v46 = vld [vmem:[%s2 + $0x90] sm:$0xff]
    %v47 = vld [vmem:[%s2 + $0x98] sm:$0xff]
    %v48 = vld [vmem:[%s2 + $0xa0] sm:$0xff]
    %v49 = vld [vmem:[%s2 + $0xa8] sm:$0xff]
    %v50 = vld [vmem:[%s2 + $0xb0] sm:$0xff]
    %v51 = vld [vmem:[%s2 + $0xb8] sm:$0xff]
    %v52 = vld [vmem:[%s2 + $0xc0] sm:$0xff]
    %v53 = vld [vmem:[%s2 + $0xc8] sm:$0xff]
    %v54 = vld [vmem:[%s2 + $0xd0] sm:$0xff]
    %v55 = vld [vmem:[%s2 + $0xd8] sm:$0xff]
    %v56 = vld [vmem:[%s2 + $0xe0] sm:$0xff]
    %v57 = vld [vmem:[%s2 + $0xe8] sm:$0xff]
    %v58 = vld [vmem:[%s2 + $0xf0] sm:$0xff]
    %v59 = vld [vmem:[%s2 + $0xf8] sm:$0xff]
    %v60 = vld [vmem:[%s2 + $0x100] sm:$0xff]
    %v61 = vld [vmem:[%s2 + $0x108] sm:$0xff]
    %v62 = vld [vmem:[%s2 + $0x110] sm:$0xff]
    %v63 = vld [vmem:[%s2 + $0x118] sm:$0xff]
    %v64 = vld [vmem:[%s2 + $0x120] sm:$0xff]
    %v65 = vld [vmem:[%s2 + $0x128] sm:$0xff]
    %v66 = vld [vmem:[%s2 + $0x130] sm:$0xff]
    %v67 = vld [vmem:[%s2 + $0x138] sm:$0xff]
    %v68 = vld [vmem:[%s2 + $0x140] sm:$0xff]
    %v69 = vld [vmem:[%s2 + $0x148] sm:$0xff]
    %v70 = vld [vmem:[%s2 + $0x150] sm:$0xff]
    %v71 = vld [vmem:[%s2 + $0x158] sm:$0xff]
    %v72 = vld [vmem:[%s2 + $0x160] sm:$0xff]
    %v73 = vld [vmem:[%s2 + $0x168] sm:$0xff]
    %v74 = vld [vmem:[%s2 + $0x170] sm:$0xff]
    %v75 = vld [vmem:[%s2 + $0x178] sm:$0xff]
    %v76 = vld [vmem:[%s2 + $0x180] sm:$0xff]
    %v77 = vld [vmem:[%s2 + $0x188] sm:$0xff]
    %v78 = vld [vmem:[%s2 + $0x190] sm:$0xff]
    %v79 = vld [vmem:[%s2 + $0x198] sm:$0xff]
    %v80 = vld [vmem:[%s2 + $0x1a0] sm:$0xff]
    %v81 = vld [vmem:[%s2 + $0x1a8] sm:$0xff]
    %v82 = vld [vmem:[%s2 + $0x1b0] sm:$0xff]
    %v83 = vld [vmem:[%s2 + $0x1b8] sm:$0xff]
    %v84 = vld [vmem:[%s2 + $0x1c0] sm:$0xff]
    %v85 = vld [vmem:[%s2 + $0x1c8] sm:$0xff]
    %v86 = vld [vmem:[%s2 + $0x1d0] sm:$0xff]
    %v87 = vld [vmem:[%s2 + $0x1d8] sm:$0xff]
    %v88 = vld [vmem:[%s2 + $0x1e0] sm:$0xff]
    %v89 = vld [vmem:[%s2 + $0x1e8] sm:$0xff]
    %v90 = vld [vmem:[%s2 + $0x1f0] sm:$0xff]
    %v91 = vld [vmem:[%s2 + $0x1f8] sm:$0xff]
    %v92 = vld [vmem:[%s2 + $0x200] sm:$0xff]
    %v93 = vld [vmem:[%s2 + $0x208] sm:$0xff]
    %v94 = vld [vmem:[%s2 + $0x210] sm:$0xff]
    %v95 = vld [vmem:[%s2 + $0x218] sm:$0xff]
    %v96 = vld [vmem:[%s2 + $0x220] sm:$0xff]
    %v97 = vld [vmem:[%s2 + $0x228] sm:$0xff]
    %v98 = vld [vmem:[%s2 + $0x230] sm:$0xff]
    %v99 = vld [vmem:[%s2 + $0x238] sm:$0xff]
    %v100 = vld [vmem:[%s2 + $0x240] sm:$0xff]
    %v101 = vld [vmem:[%s2 + $0x248] sm:$0xff]
    %v102 = vld [vmem:[%s2 + $0x250] sm:$0xff]
    %v103 = vld [vmem:[%s2 + $0x258] sm:$0xff]
    %v104 = vld [vmem:[%s2 + $0x260] sm:$0xff]
    %v105 = vld [vmem:[%s2 + $0x268] sm:$0xff]
    %v106 = vld [vmem:[%s2 + $0x270] sm:$0xff]
    %v107 = vld [vmem:[%s2 + $0x278] sm:$0xff]
    %v108 = vld [vmem:[%s2 + $0x280] sm:$0xff]
    %v109 = vld [vmem:[%s2 + $0x288] sm:$0xff]
    %v110 = vld [vmem:[%s2 + $0x290] sm:$0xff]
    %v111 = vld [vmem:[%s2 + $0x298] sm:$0xff]
    %v112 = vld [vmem:[%s2 + $0x2a0] sm:$0xff]
    %v113 = vld [vmem:[%s2 + $0x2a8] sm:$0xff]
    %v114 = vld [vmem:[%s2 + $0x2b0] sm:$0xff]
    %v115 = vld [vmem:[%s2 + $0x2b8] sm:$0xff]
    %v116 = vld [vmem:[%s2 + $0x2c0] sm:$0xff]
    %v117 = vld [vmem:[%s2 + $0x2c8] sm:$0xff]
    %v118 = vld [vmem:[%s2 + $0x2d0] sm:$0xff]
    %v119 = vld [vmem:[%s2 + $0x2d8] sm:$0xff]
    %v120 = vld [vmem:[%s2 + $0x2e0] sm:$0xff]
    %v121 = vld [vmem:[%s2 + $0x2e8] sm:$0xff]
    %v122 = vld [vmem:[%s2 + $0x2f0] sm:$0xff]
    %v123 = vld [vmem:[%s2 + $0x2f8] sm:$0xff]
    %v124 = vld [vmem:[%s2 + $0x300] sm:$0xff]
    %v125 = vld [vmem:[%s2 + $0x308] sm:$0xff]
    %v126 = vld [vmem:[%s2 + $0x310] sm:$0xff]
    %v127 = vld [vmem:[%s2 + $0x318] sm:$0xff]
    %v128 = vld [vmem:[%s2 + $0x320] sm:$0xff]
    %v129 = vld [vmem:[%s2 + $0x328] sm:$0xff]
    %v130 = vld [vmem:[%s2 + $0x330] sm:$0xff]
    %v131 = vld [vmem:[%s2 + $0x338] sm:$0xff]
    %v132 = vld [vmem:[%s2 + $0x340] sm:$0xff]
    %v133 = vld [vmem:[%s2 + $0x348] sm:$0xff]
    %v134 = vld [vmem:[%s2 + $0x350] sm:$0xff]
    %v135 = vld [vmem:[%s2 + $0x358] sm:$0xff]
    %v136 = vld [vmem:[%s2 + $0x360] sm:$0xff]
    %v137 = vld [vmem:[%s2 + $0x368] sm:$0xff]
    %v138 = vld [vmem:[%s2 + $0x370] sm:$0xff]
    %v139 = vld [vmem:[%s2 + $0x378] sm:$0xff]
    %v140 = vld [vmem:[%s2 + $0x380] sm:$0xff]
    %v141 = vld [vmem:[%s2 + $0x388] sm:$0xff]
    %v142 = vld [vmem:[%s2 + $0x390] sm:$0xff]
    %v143 = vld [vmem:[%s2 + $0x398] sm:$0xff]
    %v144 = vld [vmem:[%s2 + $0x3a0] sm:$0xff]
    %v145 = vld [vmem:[%s2 + $0x3a8] sm:$0xff]
    %v146 = vld [vmem:[%s2 + $0x3b0] sm:$0xff]
    %v148 = vlaneseq
    %v149 = vshrl.u32 %v148, 7
    %v150 = vsub.s32 0, %v149
    %v151 = vrot.slane %v27, %v150
    %v152 = vlaneseq
    %v153 = vshrl.u32 %v152, 7
    %v154 = vsub.s32 1, %v153
    %v155 = vrot.slane %v27, %v154
    %v156 = vlaneseq
    %v157 = vshrl.u32 %v156, 7
    %v158 = vsub.s32 2, %v157
    %v159 = vrot.slane %v27, %v158
    %v160 = vlaneseq
    %v161 = vshrl.u32 %v160, 7
    %v162 = vsub.s32 3, %v161
    %v163 = vrot.slane %v27, %v162
    %v164 = vlaneseq
    %v165 = vshrl.u32 %v164, 7
    %v166 = vsub.s32 4, %v165
    %v167 = vrot.slane %v27, %v166
    %v168 = vlaneseq
    %v169 = vshrl.u32 %v168, 7
    %v170 = vsub.s32 5, %v169
    %v171 = vrot.slane %v27, %v170
    %v172 = vlaneseq
    %v173 = vshrl.u32 %v172, 7
    %v174 = vsub.s32 6, %v173
    %v175 = vrot.slane %v27, %v174
    %v183 = vmul.f32 %v28, %v151
    %v184 = vmul.f32 %v29, %v155
    %v185 = vmul.f32 %v30, %v159
    %v186 = vmul.f32 %v31, %v163
    %v187 = vmul.f32 %v32, %v167
    %v188 = vmul.f32 %v33, %v171
    %v189 = vmul.f32 %v34, %v175
    %v190 = vmul.f32 %v35, %v151
    %v191 = vmul.f32 %v36, %v155
    %v192 = vmul.f32 %v37, %v159
    %v193 = vmul.f32 %v38, %v163
    %v194 = vmul.f32 %v39, %v167
    %v195 = vmul.f32 %v40, %v171
    %v196 = vmul.f32 %v41, %v175
    %v197 = vmul.f32 %v42, %v151
    %v198 = vmul.f32 %v43, %v155
    %v199 = vmul.f32 %v44, %v159
    %v200 = vmul.f32 %v45, %v163
    %v201 = vmul.f32 %v46, %v167
    %v202 = vmul.f32 %v47, %v171
    %v203 = vmul.f32 %v48, %v175
    %v204 = vmul.f32 %v49, %v151
    %v205 = vmul.f32 %v50, %v155
    %v206 = vmul.f32 %v51, %v159
    %v207 = vmul.f32 %v52, %v163
    %v208 = vmul.f32 %v53, %v167
    %v209 = vmul.f32 %v54, %v171
    %v210 = vmul.f32 %v55, %v175
    %v211 = vmul.f32 %v56, %v151
    %v212 = vmul.f32 %v57, %v155
    %v213 = vmul.f32 %v58, %v159
    %v214 = vmul.f32 %v59, %v163
    %v215 = vmul.f32 %v60, %v167
    %v216 = vmul.f32 %v61, %v171
    %v217 = vmul.f32 %v62, %v175
    %v218 = vmul.f32 %v63, %v151
    %v219 = vmul.f32 %v64, %v155
    %v220 = vmul.f32 %v65, %v159
    %v221 = vmul.f32 %v66, %v163
    %v222 = vmul.f32 %v67, %v167
    %v223 = vmul.f32 %v68, %v171
    %v224 = vmul.f32 %v69, %v175
    %v225 = vmul.f32 %v70, %v151
    %v226 = vmul.f32 %v71, %v155
    %v227 = vmul.f32 %v72, %v159
    %v228 = vmul.f32 %v73, %v163
    %v229 = vmul.f32 %v74, %v167
    %v230 = vmul.f32 %v75, %v171
    %v231 = vmul.f32 %v76, %v175
    %v232 = vmul.f32 %v77, %v151
    %v233 = vmul.f32 %v78, %v155
    %v234 = vmul.f32 %v79, %v159
    %v235 = vmul.f32 %v80, %v163
    %v236 = vmul.f32 %v81, %v167
    %v237 = vmul.f32 %v82, %v171
    %v238 = vmul.f32 %v83, %v175
    %v239 = vmul.f32 %v84, %v151
    %v240 = vmul.f32 %v85, %v155
    %v241 = vmul.f32 %v86, %v159
    %v242 = vmul.f32 %v87, %v163
    %v243 = vmul.f32 %v88, %v167
    %v244 = vmul.f32 %v89, %v171
    %v245 = vmul.f32 %v90, %v175
    %v246 = vmul.f32 %v91, %v151
    %v247 = vmul.f32 %v92, %v155
    %v248 = vmul.f32 %v93, %v159
    %v249 = vmul.f32 %v94, %v163
    %v250 = vmul.f32 %v95, %v167
    %v251 = vmul.f32 %v96, %v171
    %v252 = vmul.f32 %v97, %v175
    %v253 = vmul.f32 %v98, %v151
    %v254 = vmul.f32 %v99, %v155
    %v255 = vmul.f32 %v100, %v159
    %v256 = vmul.f32 %v101, %v163
    %v257 = vmul.f32 %v102, %v167
    %v258 = vmul.f32 %v103, %v171
    %v259 = vmul.f32 %v104, %v175
    %v260 = vmul.f32 %v105, %v151
    %v261 = vmul.f32 %v106, %v155
    %v262 = vmul.f32 %v107, %v159
    %v263 = vmul.f32 %v108, %v163
    %v264 = vmul.f32 %v109, %v167
    %v265 = vmul.f32 %v110, %v171
    %v266 = vmul.f32 %v111, %v175
    %v267 = vmul.f32 %v112, %v151
    %v268 = vmul.f32 %v113, %v155
    %v269 = vmul.f32 %v114, %v159
    %v270 = vmul.f32 %v115, %v163
    %v271 = vmul.f32 %v116, %v167
    %v272 = vmul.f32 %v117, %v171
    %v273 = vmul.f32 %v118, %v175
    %v274 = vmul.f32 %v119, %v151
    %v275 = vmul.f32 %v120, %v155
    %v276 = vmul.f32 %v121, %v159
    %v277 = vmul.f32 %v122, %v163
    %v278 = vmul.f32 %v123, %v167
    %v279 = vmul.f32 %v124, %v171
    %v280 = vmul.f32 %v125, %v175
    %v281 = vmul.f32 %v126, %v151
    %v282 = vmul.f32 %v127, %v155
    %v283 = vmul.f32 %v128, %v159
    %v284 = vmul.f32 %v129, %v163
    %v285 = vmul.f32 %v130, %v167
    %v286 = vmul.f32 %v131, %v171
    %v287 = vmul.f32 %v132, %v175
    %v288 = vmul.f32 %v133, %v151
    %v289 = vmul.f32 %v134, %v155
    %v290 = vmul.f32 %v135, %v159
    %v291 = vmul.f32 %v136, %v163
    %v292 = vmul.f32 %v137, %v167
    %v293 = vmul.f32 %v138, %v171
    %v294 = vmul.f32 %v139, %v175
    %v295 = vmul.f32 %v140, %v151
    %v296 = vmul.f32 %v141, %v155
    %v297 = vmul.f32 %v142, %v159
    %v298 = vmul.f32 %v143, %v163
    %v299 = vmul.f32 %v144, %v167
    %v300 = vmul.f32 %v145, %v171
    %v301 = vmul.f32 %v146, %v175
    %v302 = vld [vmem:[%s0] sm:$0xff]
    %v303 = vld [vmem:[%s0 + $0x8] sm:$0xff]
    %v304 = vld [vmem:[%s0 + $0x10] sm:$0xff]
    %v305 = vld [vmem:[%s0 + $0x18] sm:$0xff]
    %v306 = vld [vmem:[%s0 + $0x20] sm:$0xff]
    %v307 = vld [vmem:[%s0 + $0x28] sm:$0xff]
    %v308 = vld [vmem:[%s0 + $0x30] sm:$0xff]
    %v309 = vld [vmem:[%s0 + $0x38] sm:$0xff]
    %v310 = vld [vmem:[%s0 + $0x40] sm:$0xff]
    %v311 = vld [vmem:[%s0 + $0x48] sm:$0xff]
    %v312 = vld [vmem:[%s0 + $0x50] sm:$0xff]
    %v313 = vld [vmem:[%s0 + $0x58] sm:$0xff]
    %v314 = vld [vmem:[%s0 + $0x60] sm:$0xff]
    %v315 = vld [vmem:[%s0 + $0x68] sm:$0xff]
    %v316 = vld [vmem:[%s0 + $0x70] sm:$0xff]
    %v317 = vld [vmem:[%s0 + $0x78] sm:$0xff]
    %v318 = vld [vmem:[%s0 + $0x80] sm:$0xff]
    %v319 = vld [vmem:[%s0 + $0x88] sm:$0xff]
    %v320 = vld [vmem:[%s0 + $0x90] sm:$0xff]
    %v321 = vld [vmem:[%s0 + $0x98] sm:$0xff]
    %v322 = vld [vmem:[%s0 + $0xa0] sm:$0xff]
    %v323 = vld [vmem:[%s0 + $0xa8] sm:$0xff]
    %v324 = vld [vmem:[%s0 + $0xb0] sm:$0xff]
    %v325 = vld [vmem:[%s0 + $0xb8] sm:$0xff]
    %v326 = vld [vmem:[%s0 + $0xc0] sm:$0xff]
    %v327 = vld [vmem:[%s0 + $0xc8] sm:$0xff]
    %v328 = vld [vmem:[%s0 + $0xd0] sm:$0xff]
    %v329 = vld [vmem:[%s0 + $0xd8] sm:$0xff]
    %v330 = vld [vmem:[%s0 + $0xe0] sm:$0xff]
    %v331 = vld [vmem:[%s0 + $0xe8] sm:$0xff]
    %v332 = vld [vmem:[%s0 + $0xf0] sm:$0xff]
    %v333 = vld [vmem:[%s0 + $0xf8] sm:$0xff]
    %v334 = vld [vmem:[%s0 + $0x100] sm:$0xff]
    %v335 = vld [vmem:[%s0 + $0x108] sm:$0xff]
    %v336 = vld [vmem:[%s0 + $0x110] sm:$0xff]
    %v337 = vld [vmem:[%s0 + $0x118] sm:$0xff]
    %v338 = vld [vmem:[%s0 + $0x120] sm:$0xff]
    %v339 = vld [vmem:[%s0 + $0x128] sm:$0xff]
    %v340 = vld [vmem:[%s0 + $0x130] sm:$0xff]
    %v341 = vld [vmem:[%s0 + $0x138] sm:$0xff]
    %v342 = vld [vmem:[%s0 + $0x140] sm:$0xff]
    %v343 = vld [vmem:[%s0 + $0x148] sm:$0xff]
    %v344 = vld [vmem:[%s0 + $0x150] sm:$0xff]
    %v345 = vld [vmem:[%s0 + $0x158] sm:$0xff]
    %v346 = vld [vmem:[%s0 + $0x160] sm:$0xff]
    %v347 = vld [vmem:[%s0 + $0x168] sm:$0xff]
    %v348 = vld [vmem:[%s0 + $0x170] sm:$0xff]
    %v349 = vld [vmem:[%s0 + $0x178] sm:$0xff]
    %v350 = vld [vmem:[%s0 + $0x180] sm:$0xff]
    %v351 = vld [vmem:[%s0 + $0x188] sm:$0xff]
    %v352 = vld [vmem:[%s0 + $0x190] sm:$0xff]
    %v353 = vld [vmem:[%s0 + $0x198] sm:$0xff]
    %v354 = vld [vmem:[%s0 + $0x1a0] sm:$0xff]
    %v355 = vld [vmem:[%s0 + $0x1a8] sm:$0xff]
    %v356 = vld [vmem:[%s0 + $0x1b0] sm:$0xff]
    %v357 = vld [vmem:[%s0 + $0x1b8] sm:$0xff]
    %v358 = vld [vmem:[%s0 + $0x1c0] sm:$0xff]
    %v359 = vld [vmem:[%s0 + $0x1c8] sm:$0xff]
    %v360 = vld [vmem:[%s0 + $0x1d0] sm:$0xff]
    %v361 = vld [vmem:[%s0 + $0x1d8] sm:$0xff]
    %v362 = vld [vmem:[%s0 + $0x1e0] sm:$0xff]
    %v363 = vld [vmem:[%s0 + $0x1e8] sm:$0xff]
    %v364 = vld [vmem:[%s0 + $0x1f0] sm:$0xff]
    %v365 = vld [vmem:[%s0 + $0x1f8] sm:$0xff]
    %v366 = vld [vmem:[%s0 + $0x200] sm:$0xff]
    %v367 = vld [vmem:[%s0 + $0x208] sm:$0xff]
    %v368 = vld [vmem:[%s0 + $0x210] sm:$0xff]
    %v369 = vld [vmem:[%s0 + $0x218] sm:$0xff]
    %v370 = vld [vmem:[%s0 + $0x220] sm:$0xff]
    %v371 = vld [vmem:[%s0 + $0x228] sm:$0xff]
    %v372 = vld [vmem:[%s0 + $0x230] sm:$0xff]
    %v373 = vld [vmem:[%s0 + $0x238] sm:$0xff]
    %v374 = vld [vmem:[%s0 + $0x240] sm:$0xff]
    %v375 = vld [vmem:[%s0 + $0x248] sm:$0xff]
    %v376 = vld [vmem:[%s0 + $0x250] sm:$0xff]
    %v377 = vld [vmem:[%s0 + $0x258] sm:$0xff]
    %v378 = vld [vmem:[%s0 + $0x260] sm:$0xff]
    %v379 = vld [vmem:[%s0 + $0x268] sm:$0xff]
    %v380 = vld [vmem:[%s0 + $0x270] sm:$0xff]
    %v381 = vld [vmem:[%s0 + $0x278] sm:$0xff]
    %v382 = vld [vmem:[%s0 + $0x280] sm:$0xff]
    %v383 = vld [vmem:[%s0 + $0x288] sm:$0xff]
    %v384 = vld [vmem:[%s0 + $0x290] sm:$0xff]
    %v385 = vld [vmem:[%s0 + $0x298] sm:$0xff]
    %v386 = vld [vmem:[%s0 + $0x2a0] sm:$0xff]
    %v387 = vld [vmem:[%s0 + $0x2a8] sm:$0xff]
    %v388 = vld [vmem:[%s0 + $0x2b0] sm:$0xff]
    %v389 = vld [vmem:[%s0 + $0x2b8] sm:$0xff]
    %v390 = vld [vmem:[%s0 + $0x2c0] sm:$0xff]
    %v391 = vld [vmem:[%s0 + $0x2c8] sm:$0xff]
    %v392 = vld [vmem:[%s0 + $0x2d0] sm:$0xff]
    %v393 = vld [vmem:[%s0 + $0x2d8] sm:$0xff]
    %v394 = vld [vmem:[%s0 + $0x2e0] sm:$0xff]
    %v395 = vld [vmem:[%s0 + $0x2e8] sm:$0xff]
    %v396 = vld [vmem:[%s0 + $0x2f0] sm:$0xff]
    %v397 = vld [vmem:[%s0 + $0x2f8] sm:$0xff]
    %v398 = vld [vmem:[%s0 + $0x300] sm:$0xff]
    %v399 = vld [vmem:[%s0 + $0x308] sm:$0xff]
    %v400 = vld [vmem:[%s0 + $0x310] sm:$0xff]
    %v401 = vld [vmem:[%s0 + $0x318] sm:$0xff]
    %v402 = vld [vmem:[%s0 + $0x320] sm:$0xff]
    %v403 = vld [vmem:[%s0 + $0x328] sm:$0xff]
    %v404 = vld [vmem:[%s0 + $0x330] sm:$0xff]
    %v405 = vld [vmem:[%s0 + $0x338] sm:$0xff]
    %v406 = vld [vmem:[%s0 + $0x340] sm:$0xff]
    %v407 = vld [vmem:[%s0 + $0x348] sm:$0xff]
    %v408 = vld [vmem:[%s0 + $0x350] sm:$0xff]
    %v409 = vld [vmem:[%s0 + $0x358] sm:$0xff]
    %v410 = vld [vmem:[%s0 + $0x360] sm:$0xff]
    %v411 = vld [vmem:[%s0 + $0x368] sm:$0xff]
    %v412 = vld [vmem:[%s0 + $0x370] sm:$0xff]
    %v413 = vld [vmem:[%s0 + $0x378] sm:$0xff]
    %v414 = vld [vmem:[%s0 + $0x380] sm:$0xff]
    %v415 = vld [vmem:[%s0 + $0x388] sm:$0xff]
    %v416 = vld [vmem:[%s0 + $0x390] sm:$0xff]
    %v417 = vld [vmem:[%s0 + $0x398] sm:$0xff]
    %v418 = vld [vmem:[%s0 + $0x3a0] sm:$0xff]
    %v419 = vld [vmem:[%s0 + $0x3a8] sm:$0xff]
    %v420 = vld [vmem:[%s0 + $0x3b0] sm:$0xff]
    %v421 = vld [vmem:[%s0 + $0x3b8] sm:$0xff]
    %v422 = vld [vmem:[%s0 + $0x3c0] sm:$0xff]
    %v423 = vld [vmem:[%s0 + $0x3c8] sm:$0xff]
    %v424 = vld [vmem:[%s0 + $0x3d0] sm:$0xff]
    %v425 = vld [vmem:[%s0 + $0x3d8] sm:$0xff]
    %v426 = vld [vmem:[%s0 + $0x3e0] sm:$0xff]
    %v427 = vld [vmem:[%s0 + $0x3e8] sm:$0xff]
    %v428 = vld [vmem:[%s0 + $0x3f0] sm:$0xff]
    %v429 = vld [vmem:[%s0 + $0x3f8] sm:$0xff]
    %v430 = vld [vmem:[%s0 + $0x400] sm:$0xff]
    %v431 = vld [vmem:[%s0 + $0x408] sm:$0xff]
    %v432 = vld [vmem:[%s0 + $0x410] sm:$0xff]
    %v433 = vld [vmem:[%s0 + $0x418] sm:$0xff]
    %v434 = vld [vmem:[%s0 + $0x420] sm:$0xff]
    %v435 = vld [vmem:[%s0 + $0x428] sm:$0xff]
    %v436 = vld [vmem:[%s0 + $0x430] sm:$0xff]
    %v437 = vld [vmem:[%s0 + $0x438] sm:$0xff]
    %v438 = vld [vmem:[%s0 + $0x440] sm:$0xff]
    %v439 = vld [vmem:[%s0 + $0x448] sm:$0xff]
    %v440 = vld [vmem:[%s0 + $0x450] sm:$0xff]
    %v441 = vld [vmem:[%s0 + $0x458] sm:$0xff]
    %v442 = vld [vmem:[%s0 + $0x460] sm:$0xff]
    %v443 = vld [vmem:[%s0 + $0x468] sm:$0xff]
    %v444 = vld [vmem:[%s0 + $0x470] sm:$0xff]
    %v445 = vld [vmem:[%s0 + $0x478] sm:$0xff]
    %v446 = vld [vmem:[%s0 + $0x480] sm:$0xff]
    %v447 = vld [vmem:[%s0 + $0x488] sm:$0xff]
    %v448 = vld [vmem:[%s0 + $0x490] sm:$0xff]
    %v449 = vld [vmem:[%s0 + $0x498] sm:$0xff]
    %v450 = vld [vmem:[%s0 + $0x4a0] sm:$0xff]
    %v451 = vld [vmem:[%s0 + $0x4a8] sm:$0xff]
    %v452 = vld [vmem:[%s0 + $0x4b0] sm:$0xff]
    %v453 = vld [vmem:[%s0 + $0x4b8] sm:$0xff]
    %v454 = vld [vmem:[%s0 + $0x4c0] sm:$0xff]
    %v455 = vld [vmem:[%s0 + $0x4c8] sm:$0xff]
    %v456 = vld [vmem:[%s0 + $0x4d0] sm:$0xff]
    %v457 = vld [vmem:[%s0 + $0x4d8] sm:$0xff]
    %v458 = vld [vmem:[%s0 + $0x4e0] sm:$0xff]
    %v459 = vld [vmem:[%s0 + $0x4e8] sm:$0xff]
    %v460 = vld [vmem:[%s0 + $0x4f0] sm:$0xff]
    %v461 = vld [vmem:[%s0 + $0x4f8] sm:$0xff]
    %v462 = vld [vmem:[%s0 + $0x500] sm:$0xff]
    %v463 = vld [vmem:[%s0 + $0x508] sm:$0xff]
    %v464 = vld [vmem:[%s0 + $0x510] sm:$0xff]
    %v465 = vld [vmem:[%s0 + $0x518] sm:$0xff]
    %v466 = vld [vmem:[%s0 + $0x520] sm:$0xff]
    %v467 = vld [vmem:[%s0 + $0x528] sm:$0xff]
    %v468 = vld [vmem:[%s0 + $0x530] sm:$0xff]
    %v469 = vld [vmem:[%s0 + $0x538] sm:$0xff]
    %v470 = vld [vmem:[%s0 + $0x540] sm:$0xff]
    %v471 = vld [vmem:[%s0 + $0x548] sm:$0xff]
    %v472 = vld [vmem:[%s0 + $0x550] sm:$0xff]
    %v473 = vld [vmem:[%s0 + $0x558] sm:$0xff]
    %v474 = vld [vmem:[%s0 + $0x560] sm:$0xff]
    %v475 = vld [vmem:[%s0 + $0x568] sm:$0xff]
    %v476 = vld [vmem:[%s0 + $0x570] sm:$0xff]
    %v477 = vld [vmem:[%s0 + $0x578] sm:$0xff]
    %v478 = vld [vmem:[%s0 + $0x580] sm:$0xff]
    %v479 = vld [vmem:[%s0 + $0x588] sm:$0xff]
    %v480 = vld [vmem:[%s0 + $0x590] sm:$0xff]
    %v481 = vld [vmem:[%s0 + $0x598] sm:$0xff]
    %v482 = vld [vmem:[%s0 + $0x5a0] sm:$0xff]
    %v483 = vld [vmem:[%s0 + $0x5a8] sm:$0xff]
    %v484 = vld [vmem:[%s0 + $0x5b0] sm:$0xff]
    %v485 = vld [vmem:[%s0 + $0x5b8] sm:$0xff]
    %v486 = vld [vmem:[%s0 + $0x5c0] sm:$0xff]
    %v487 = vld [vmem:[%s0 + $0x5c8] sm:$0xff]
    %v488 = vld [vmem:[%s0 + $0x5d0] sm:$0xff]
    %v489 = vld [vmem:[%s0 + $0x5d8] sm:$0xff]
    %v490 = vld [vmem:[%s0 + $0x5e0] sm:$0xff]
    %v491 = vld [vmem:[%s0 + $0x5e8] sm:$0xff]
    %v492 = vld [vmem:[%s0 + $0x5f0] sm:$0xff]
    %v493 = vld [vmem:[%s0 + $0x5f8] sm:$0xff]
    %v494 = vld [vmem:[%s0 + $0x600] sm:$0xff]
    %v495 = vld [vmem:[%s0 + $0x608] sm:$0xff]
    %v496 = vld [vmem:[%s0 + $0x610] sm:$0xff]
    %v497 = vld [vmem:[%s0 + $0x618] sm:$0xff]
    %v498 = vld [vmem:[%s0 + $0x620] sm:$0xff]
    %v499 = vld [vmem:[%s0 + $0x628] sm:$0xff]
    %v500 = vld [vmem:[%s0 + $0x630] sm:$0xff]
    %v501 = vld [vmem:[%s0 + $0x638] sm:$0xff]
    %v502 = vld [vmem:[%s0 + $0x640] sm:$0xff]
    %v503 = vld [vmem:[%s0 + $0x648] sm:$0xff]
    %v504 = vld [vmem:[%s0 + $0x650] sm:$0xff]
    %v505 = vld [vmem:[%s0 + $0x658] sm:$0xff]
    %vm506 = vcmask 392192
    %v508 = vsel %vm506, %v189, 0
    %v511 = vsel %vm506, %v196, 0
    %v514 = vsel %vm506, %v203, 0
    %v517 = vsel %vm506, %v210, 0
    %v520 = vsel %vm506, %v217, 0
    %v523 = vsel %vm506, %v224, 0
    %v526 = vsel %vm506, %v231, 0
    %v529 = vsel %vm506, %v238, 0
    %v532 = vsel %vm506, %v245, 0
    %v535 = vsel %vm506, %v252, 0
    %v538 = vsel %vm506, %v259, 0
    %v541 = vsel %vm506, %v266, 0
    %v544 = vsel %vm506, %v273, 0
    %v547 = vsel %vm506, %v280, 0
    %v550 = vsel %vm506, %v287, 0
    %v553 = vsel %vm506, %v294, 0
    %v556 = vsel %vm506, %v301, 0
    %558 = vmatprep.subr.mxu0 %v303
    %559 = vmatpush1.msra.mxu0 %v302
    %560 = vmatprep.subr.mxu0 %v305
    %561 = vmatpush1.msra.mxu0 %v304
    %562 = vmatprep.subr.mxu0 %v307
    %563 = vmatpush1.msra.mxu0 %v306
    %564 = vmatprep.subr.mxu0 %v309
    %565 = vmatpush1.msra.mxu0 %v308
    %566 = vmatprep.subr.mxu0 %v311
    %567 = vmatpush1.msra.mxu0 %v310
    %568 = vmatprep.subr.mxu0 %v313
    %569 = vmatpush1.msra.mxu0 %v312
    %570 = vmatprep.subr.mxu0 %v315
    %571 = vmatpush1.msra.mxu0 %v314
    %572 = vmatprep.subr.mxu0 %v317
    %573 = vmatpush1.msra.mxu0 %v316
    %574 = vmatprep.subr.mxu0 %v319
    %575 = vmatpush1.msra.mxu0 %v318
    %576 = vmatprep.subr.mxu0 %v321
    %577 = vmatpush1.msra.mxu0 %v320
    %578 = vmatprep.subr.mxu0 %v323
    %579 = vmatpush1.msra.mxu0 %v322
    %580 = vmatprep.subr.mxu0 %v325
    %581 = vmatpush1.msra.mxu0 %v324
    %582 = vmatprep.subr.mxu0 %v327
    %583 = vmatpush1.msra.mxu0 %v326
    %584 = vmatprep.subr.mxu0 %v329
    %585 = vmatpush1.msra.mxu0 %v328
    %586 = vmatprep.subr.mxu0 %v331
    %587 = vmatpush1.msra.mxu0 %v330
    %588 = vmatprep.subr.mxu0 %v333
    %589 = vmatpush1.msra.mxu0 %v332
    %590 = vmatprep.subr.mxu0 %v335
    %591 = vmatpush1.msra.mxu0 %v334
    %592 = vmatprep.subr.mxu0 %v337
    %593 = vmatpush1.msra.mxu0 %v336
    %594 = vmatprep.subr.mxu0 %v339
    %595 = vmatpush1.msra.mxu0 %v338
    %596 = vmatprep.subr.mxu0 %v341
    %597 = vmatpush1.msra.mxu0 %v340
    %598 = vmatprep.subr.mxu0 %v343
    %599 = vmatpush1.msra.mxu0 %v342
    %600 = vmatprep.subr.mxu0 %v345
    %601 = vmatpush1.msra.mxu0 %v344
    %602 = vmatprep.subr.mxu0 %v347
    %603 = vmatpush1.msra.mxu0 %v346
    %604 = vmatprep.subr.mxu0 %v349
    %605 = vmatpush1.msra.mxu0 %v348
    %606 = vmatprep.subr.mxu0 %v351
    %607 = vmatpush1.msra.mxu0 %v350
    %608 = vmatprep.subr.mxu0 %v353
    %609 = vmatpush1.msra.mxu0 %v352
    %610 = vmatprep.subr.mxu0 %v355
    %611 = vmatpush1.msra.mxu0 %v354
    %612 = vmatprep.subr.mxu0 %v357
    %613 = vmatpush1.msra.mxu0 %v356
    %614 = vmatprep.subr.mxu0 %v359
    %615 = vmatpush1.msra.mxu0 %v358
    %616 = vmatprep.subr.mxu0 %v361
    %617 = vmatpush1.msra.mxu0 %v360
    %618 = vmatprep.subr.mxu0 %v363
    %619 = vmatpush1.msra.mxu0 %v362
    %620 = vmatprep.subr.mxu0 %v365
    %621 = vmatpush1.msra.mxu0 %v364
    %622 = vmatprep.mubr.f32.mxu0 %v184
    %623 = vmatmul.mubr.f32.gmra.mrb[0].mxu0 %v183
    %v624 = vpop.f32.mrb[0].mxu0
    %v625 = vadd.f32 0.0, %v624
    %v626 = vpop.f32.mrb[0].mxu0
    %v627 = vadd.f32 0.0, %v626
    %628 = vmatprep.mubr.f32.mxu0 %v191
    %629 = vmatmul.mubr.f32.gmra.mrb[0].mxu0 %v190
    %v630 = vpop.f32.mrb[0].mxu0
    %v631 = vadd.f32 0.0, %v630
    %v632 = vpop.f32.mrb[0].mxu0
    %v633 = vadd.f32 0.0, %v632
    %634 = vmatprep.mubr.f32.mxu0 %v198
    %635 = vmatmul.mubr.f32.gmra.mrb[0].mxu0 %v197
    %v636 = vpop.f32.mrb[0].mxu0
    %v637 = vadd.f32 0.0, %v636
    %v638 = vpop.f32.mrb[0].mxu0
    %v639 = vadd.f32 0.0, %v638
    %640 = vmatprep.mubr.f32.mxu0 %v205
    %641 = vmatmul.mubr.f32.gmra.mrb[0].mxu0 %v204
    %v642 = vpop.f32.mrb[0].mxu0
    %v643 = vadd.f32 0.0, %v642
    %v644 = vpop.f32.mrb[0].mxu0
    %v645 = vadd.f32 0.0, %v644
    %646 = vmatprep.mubr.f32.mxu0 %v212
    %647 = vmatmul.mubr.f32.gmra.mrb[0].mxu0 %v211
    %v648 = vpop.f32.mrb[0].mxu0
    %v649 = vadd.f32 0.0, %v648
    %v650 = vpop.f32.mrb[0].mxu0
    %v651 = vadd.f32 0.0, %v650
    %652 = vmatprep.mubr.f32.mxu0 %v219
    %653 = vmatmul.mubr.f32.gmra.mrb[0].mxu0 %v218
    %v654 = vpop.f32.mrb[0].mxu0
    %v655 = vadd.f32 0.0, %v654
    %v656 = vpop.f32.mrb[0].mxu0
    %v657 = vadd.f32 0.0, %v656
    %658 = vmatprep.mubr.f32.mxu0 %v226
    %659 = vmatmul.mubr.f32.gmra.mrb[0].mxu0 %v225
    %v660 = vpop.f32.mrb[0].mxu0
    %v661 = vadd.f32 0.0, %v660
    %v662 = vpop.f32.mrb[0].mxu0
    %v663 = vadd.f32 0.0, %v662
    %664 = vmatprep.mubr.f32.mxu0 %v233
    %665 = vmatmul.mubr.f32.gmra.mrb[0].mxu0 %v232
    %v666 = vpop.f32.mrb[0].mxu0
    %v667 = vadd.f32 0.0, %v666
    %v668 = vpop.f32.mrb[0].mxu0
    %v669 = vadd.f32 0.0, %v668
    %670 = vmatprep.mubr.f32.mxu0 %v240
    %671 = vmatmul.mubr.f32.gmra.mrb[0].mxu0 %v239
    %v672 = vpop.f32.mrb[0].mxu0
    %v673 = vadd.f32 0.0, %v672
    %v674 = vpop.f32.mrb[0].mxu0
    %v675 = vadd.f32 0.0, %v674
    %676 = vmatprep.mubr.f32.mxu0 %v247
    %677 = vmatmul.mubr.f32.gmra.mrb[0].mxu0 %v246
    %v678 = vpop.f32.mrb[0].mxu0
    %v679 = vadd.f32 0.0, %v678
    %v680 = vpop.f32.mrb[0].mxu0
    %v681 = vadd.f32 0.0, %v680
    %682 = vmatprep.mubr.f32.mxu0 %v254
    %683 = vmatmul.mubr.f32.gmra.mrb[0].mxu0 %v253
    %v684 = vpop.f32.mrb[0].mxu0
    %v685 = vadd.f32 0.0, %v684
    %v686 = vpop.f32.mrb[0].mxu0
    %v687 = vadd.f32 0.0, %v686
    %688 = vmatprep.mubr.f32.mxu0 %v261
    %689 = vmatmul.mubr.f32.gmra.mrb[0].mxu0 %v260
    %v690 = vpop.f32.mrb[0].mxu0
    %v691 = vadd.f32 0.0, %v690
    %v692 = vpop.f32.mrb[0].mxu0
    %v693 = vadd.f32 0.0, %v692
    %694 = vmatprep.mubr.f32.mxu0 %v268
    %695 = vmatmul.mubr.f32.gmra.mrb[0].mxu0 %v267
    %v696 = vpop.f32.mrb[0].mxu0
    %v697 = vadd.f32 0.0, %v696
    %v698 = vpop.f32.mrb[0].mxu0
    %v699 = vadd.f32 0.0, %v698
    %700 = vmatprep.mubr.f32.mxu0 %v275
    %701 = vmatmul.mubr.f32.gmra.mrb[0].mxu0 %v274
    %v702 = vpop.f32.mrb[0].mxu0
    %v703 = vadd.f32 0.0, %v702
    %v704 = vpop.f32.mrb[0].mxu0
    %v705 = vadd.f32 0.0, %v704
    %706 = vmatprep.mubr.f32.mxu0 %v282
    %707 = vmatmul.mubr.f32.gmra.mrb[0].mxu0 %v281
    %v708 = vpop.f32.mrb[0].mxu0
    %v709 = vadd.f32 0.0, %v708
    %v710 = vpop.f32.mrb[0].mxu0
    %v711 = vadd.f32 0.0, %v710
    %712 = vmatprep.mubr.f32.mxu0 %v289
    %713 = vmatmul.mubr.f32.gmra.mrb[0].mxu0 %v288
    %v714 = vpop.f32.mrb[0].mxu0
    %v715 = vadd.f32 0.0, %v714
    %v716 = vpop.f32.mrb[0].mxu0
    %v717 = vadd.f32 0.0, %v716
    %718 = vmatprep.mubr.f32.mxu0 %v296
    %719 = vmatmul.mubr.f32.gmra.mrb[0].mxu0 %v295
    %v720 = vpop.f32.mrb[0].mxu0
    %v721 = vadd.f32 0.0, %v720
    %v722 = vpop.f32.mrb[0].mxu0
    %v723 = vadd.f32 0.0, %v722
    %724 = vdwg.mxu0
    %725 = vmatprep.subr.mxu0 %v367
    %726 = vmatpush1.msra.mxu0 %v366
    %727 = vmatprep.subr.mxu0 %v369
    %728 = vmatpush1.msra.mxu0 %v368
    %729 = vmatprep.subr.mxu0 %v371
    %730 = vmatpush1.msra.mxu0 %v370
    %731 = vmatprep.subr.mxu0 %v373
    %732 = vmatpush1.msra.mxu0 %v372
    %733 = vmatprep.subr.mxu0 %v375
    %734 = vmatpush1.msra.mxu0 %v374
    %735 = vmatprep.subr.mxu0 %v377
    %736 = vmatpush1.msra.mxu0 %v376
    %737 = vmatprep.subr.mxu0 %v379
    %738 = vmatpush1.msra.mxu0 %v378
    %739 = vmatprep.subr.mxu0 %v381
    %740 = vmatpush1.msra.mxu0 %v380
    %741 = vmatprep.subr.mxu0 %v383
    %742 = vmatpush1.msra.mxu0 %v382
    %743 = vmatprep.subr.mxu0 %v385
    %744 = vmatpush1.msra.mxu0 %v384
    %745 = vmatprep.subr.mxu0 %v387
    %746 = vmatpush1.msra.mxu0 %v386
    %747 = vmatprep.subr.mxu0 %v389
    %748 = vmatpush1.msra.mxu0 %v388
    %749 = vmatprep.subr.mxu0 %v391
    %750 = vmatpush1.msra.mxu0 %v390
    %751 = vmatprep.subr.mxu0 %v393
    %752 = vmatpush1.msra.mxu0 %v392
    %753 = vmatprep.subr.mxu0 %v395
    %754 = vmatpush1.msra.mxu0 %v394
    %755 = vmatprep.subr.mxu0 %v397
    %756 = vmatpush1.msra.mxu0 %v396
    %757 = vmatprep.subr.mxu0 %v399
    %758 = vmatpush1.msra.mxu0 %v398
    %759 = vmatprep.subr.mxu0 %v401
    %760 = vmatpush1.msra.mxu0 %v400
    %761 = vmatprep.subr.mxu0 %v403
    %762 = vmatpush1.msra.mxu0 %v402
    %763 = vmatprep.subr.mxu0 %v405
    %764 = vmatpush1.msra.mxu0 %v404
    %765 = vmatprep.subr.mxu0 %v407
    %766 = vmatpush1.msra.mxu0 %v406
    %767 = vmatprep.subr.mxu0 %v409
    %768 = vmatpush1.msra.mxu0 %v408
    %769 = vmatprep.subr.mxu0 %v411
    %770 = vmatpush1.msra.mxu0 %v410
    %771 = vmatprep.subr.mxu0 %v413
    %772 = vmatpush1.msra.mxu0 %v412
    %773 = vmatprep.subr.mxu0 %v415
    %774 = vmatpush1.msra.mxu0 %v414
    %775 = vmatprep.subr.mxu0 %v417
    %776 = vmatpush1.msra.mxu0 %v416
    %777 = vmatprep.subr.mxu0 %v419
    %778 = vmatpush1.msra.mxu0 %v418
    %779 = vmatprep.subr.mxu0 %v421
    %780 = vmatpush1.msra.mxu0 %v420
    %781 = vmatprep.subr.mxu0 %v423
    %782 = vmatpush1.msra.mxu0 %v422
    %783 = vmatprep.subr.mxu0 %v425
    %784 = vmatpush1.msra.mxu0 %v424
    %785 = vmatprep.subr.mxu0 %v427
    %786 = vmatpush1.msra.mxu0 %v426
    %787 = vmatprep.subr.mxu0 %v429
    %788 = vmatpush1.msra.mxu0 %v428
    %789 = vmatprep.mubr.f32.mxu0 %v186
    %790 = vmatmul.mubr.f32.gmra.mrb[0].mxu0 %v185
    %v791 = vpop.f32.mrb[0].mxu0
    %v792 = vadd.f32 %v625, %v791
    %v793 = vpop.f32.mrb[0].mxu0
    %v794 = vadd.f32 %v627, %v793
    %795 = vmatprep.mubr.f32.mxu0 %v193
    %796 = vmatmul.mubr.f32.gmra.mrb[0].mxu0 %v192
    %v797 = vpop.f32.mrb[0].mxu0
    %v798 = vadd.f32 %v631, %v797
    %v799 = vpop.f32.mrb[0].mxu0
    %v800 = vadd.f32 %v633, %v799
    %801 = vmatprep.mubr.f32.mxu0 %v200
    %802 = vmatmul.mubr.f32.gmra.mrb[0].mxu0 %v199
    %v803 = vpop.f32.mrb[0].mxu0
    %v804 = vadd.f32 %v637, %v803
    %v805 = vpop.f32.mrb[0].mxu0
    %v806 = vadd.f32 %v639, %v805
    %807 = vmatprep.mubr.f32.mxu0 %v207
    %808 = vmatmul.mubr.f32.gmra.mrb[0].mxu0 %v206
    %v809 = vpop.f32.mrb[0].mxu0
    %v810 = vadd.f32 %v643, %v809
    %v811 = vpop.f32.mrb[0].mxu0
    %v812 = vadd.f32 %v645, %v811
    %813 = vmatprep.mubr.f32.mxu0 %v214
    %814 = vmatmul.mubr.f32.gmra.mrb[0].mxu0 %v213
    %v815 = vpop.f32.mrb[0].mxu0
    %v816 = vadd.f32 %v649, %v815
    %v817 = vpop.f32.mrb[0].mxu0
    %v818 = vadd.f32 %v651, %v817
    %819 = vmatprep.mubr.f32.mxu0 %v221
    %820 = vmatmul.mubr.f32.gmra.mrb[0].mxu0 %v220
    %v821 = vpop.f32.mrb[0].mxu0
    %v822 = vadd.f32 %v655, %v821
    %v823 = vpop.f32.mrb[0].mxu0
    %v824 = vadd.f32 %v657, %v823
    %825 = vmatprep.mubr.f32.mxu0 %v228
    %826 = vmatmul.mubr.f32.gmra.mrb[0].mxu0 %v227
    %v827 = vpop.f32.mrb[0].mxu0
    %v828 = vadd.f32 %v661, %v827
    %v829 = vpop.f32.mrb[0].mxu0
    %v830 = vadd.f32 %v663, %v829
    %831 = vmatprep.mubr.f32.mxu0 %v235
    %832 = vmatmul.mubr.f32.gmra.mrb[0].mxu0 %v234
    %v833 = vpop.f32.mrb[0].mxu0
    %v834 = vadd.f32 %v667, %v833
    %v835 = vpop.f32.mrb[0].mxu0
    %v836 = vadd.f32 %v669, %v835
    %837 = vmatprep.mubr.f32.mxu0 %v242
    %838 = vmatmul.mubr.f32.gmra.mrb[0].mxu0 %v241
    %v839 = vpop.f32.mrb[0].mxu0
    %v840 = vadd.f32 %v673, %v839
    %v841 = vpop.f32.mrb[0].mxu0
    %v842 = vadd.f32 %v675, %v841
    %843 = vmatprep.mubr.f32.mxu0 %v249
    %844 = vmatmul.mubr.f32.gmra.mrb[0].mxu0 %v248
    %v845 = vpop.f32.mrb[0].mxu0
    %v846 = vadd.f32 %v679, %v845
    %v847 = vpop.f32.mrb[0].mxu0
    %v848 = vadd.f32 %v681, %v847
    %849 = vmatprep.mubr.f32.mxu0 %v256
    %850 = vmatmul.mubr.f32.gmra.mrb[0].mxu0 %v255
    %v851 = vpop.f32.mrb[0].mxu0
    %v852 = vadd.f32 %v685, %v851
    %v853 = vpop.f32.mrb[0].mxu0
    %v854 = vadd.f32 %v687, %v853
    %855 = vmatprep.mubr.f32.mxu0 %v263
    %856 = vmatmul.mubr.f32.gmra.mrb[0].mxu0 %v262
    %v857 = vpop.f32.mrb[0].mxu0
    %v858 = vadd.f32 %v691, %v857
    %v859 = vpop.f32.mrb[0].mxu0
    %v860 = vadd.f32 %v693, %v859
    %861 = vmatprep.mubr.f32.mxu0 %v270
    %862 = vmatmul.mubr.f32.gmra.mrb[0].mxu0 %v269
    %v863 = vpop.f32.mrb[0].mxu0
    %v864 = vadd.f32 %v697, %v863
    %v865 = vpop.f32.mrb[0].mxu0
    %v866 = vadd.f32 %v699, %v865
    %867 = vmatprep.mubr.f32.mxu0 %v277
    %868 = vmatmul.mubr.f32.gmra.mrb[0].mxu0 %v276
    %v869 = vpop.f32.mrb[0].mxu0
    %v870 = vadd.f32 %v703, %v869
    %v871 = vpop.f32.mrb[0].mxu0
    %v872 = vadd.f32 %v705, %v871
    %873 = vmatprep.mubr.f32.mxu0 %v284
    %874 = vmatmul.mubr.f32.gmra.mrb[0].mxu0 %v283
    %v875 = vpop.f32.mrb[0].mxu0
    %v876 = vadd.f32 %v709, %v875
    %v877 = vpop.f32.mrb[0].mxu0
    %v878 = vadd.f32 %v711, %v877
    %879 = vmatprep.mubr.f32.mxu0 %v291
    %880 = vmatmul.mubr.f32.gmra.mrb[0].mxu0 %v290
    %v881 = vpop.f32.mrb[0].mxu0
    %v882 = vadd.f32 %v715, %v881
    %v883 = vpop.f32.mrb[0].mxu0
    %v884 = vadd.f32 %v717, %v883
    %885 = vmatprep.mubr.f32.mxu0 %v298
    %886 = vmatmul.mubr.f32.gmra.mrb[0].mxu0 %v297
    %v887 = vpop.f32.mrb[0].mxu0
    %v888 = vadd.f32 %v721, %v887
    %v889 = vpop.f32.mrb[0].mxu0
    %v890 = vadd.f32 %v723, %v889
    %891 = vdwg.mxu0
    %892 = vmatprep.subr.mxu0 %v431
    %893 = vmatpush1.msra.mxu0 %v430
    %894 = vmatprep.subr.mxu0 %v433
    %895 = vmatpush1.msra.mxu0 %v432
    %896 = vmatprep.subr.mxu0 %v435
    %897 = vmatpush1.msra.mxu0 %v434
    %898 = vmatprep.subr.mxu0 %v437
    %899 = vmatpush1.msra.mxu0 %v436
    %900 = vmatprep.subr.mxu0 %v439
    %901 = vmatpush1.msra.mxu0 %v438
    %902 = vmatprep.subr.mxu0 %v441
    %903 = vmatpush1.msra.mxu0 %v440
    %904 = vmatprep.subr.mxu0 %v443
    %905 = vmatpush1.msra.mxu0 %v442
    %906 = vmatprep.subr.mxu0 %v445
    %907 = vmatpush1.msra.mxu0 %v444
    %908 = vmatprep.subr.mxu0 %v447
    %909 = vmatpush1.msra.mxu0 %v446
    %910 = vmatprep.subr.mxu0 %v449
    %911 = vmatpush1.msra.mxu0 %v448
    %912 = vmatprep.subr.mxu0 %v451
    %913 = vmatpush1.msra.mxu0 %v450
    %914 = vmatprep.subr.mxu0 %v453
    %915 = vmatpush1.msra.mxu0 %v452
    %916 = vmatprep.subr.mxu0 %v455
    %917 = vmatpush1.msra.mxu0 %v454
    %918 = vmatprep.subr.mxu0 %v457
    %919 = vmatpush1.msra.mxu0 %v456
    %920 = vmatprep.subr.mxu0 %v459
    %921 = vmatpush1.msra.mxu0 %v458
    %922 = vmatprep.subr.mxu0 %v461
    %923 = vmatpush1.msra.mxu0 %v460
    %924 = vmatprep.subr.mxu0 %v463
    %925 = vmatpush1.msra.mxu0 %v462
    %926 = vmatprep.subr.mxu0 %v465
    %927 = vmatpush1.msra.mxu0 %v464
    %928 = vmatprep.subr.mxu0 %v467
    %929 = vmatpush1.msra.mxu0 %v466
    %930 = vmatprep.subr.mxu0 %v469
    %931 = vmatpush1.msra.mxu0 %v468
    %932 = vmatprep.subr.mxu0 %v471
    %933 = vmatpush1.msra.mxu0 %v470
    %934 = vmatprep.subr.mxu0 %v473
    %935 = vmatpush1.msra.mxu0 %v472
    %936 = vmatprep.subr.mxu0 %v475
    %937 = vmatpush1.msra.mxu0 %v474
    %938 = vmatprep.subr.mxu0 %v477
    %939 = vmatpush1.msra.mxu0 %v476
    %940 = vmatprep.subr.mxu0 %v479
    %941 = vmatpush1.msra.mxu0 %v478
    %942 = vmatprep.subr.mxu0 %v481
    %943 = vmatpush1.msra.mxu0 %v480
    %944 = vmatprep.subr.mxu0 %v483
    %945 = vmatpush1.msra.mxu0 %v482
    %946 = vmatprep.subr.mxu0 %v485
    %947 = vmatpush1.msra.mxu0 %v484
    %948 = vmatprep.subr.mxu0 %v487
    %949 = vmatpush1.msra.mxu0 %v486
    %950 = vmatprep.subr.mxu0 %v489
    %951 = vmatpush1.msra.mxu0 %v488
    %952 = vmatprep.subr.mxu0 %v491
    %953 = vmatpush1.msra.mxu0 %v490
    %954 = vmatprep.subr.mxu0 %v493
    %955 = vmatpush1.msra.mxu0 %v492
    %956 = vmatprep.mubr.f32.mxu0 %v188
    %957 = vmatmul.mubr.f32.gmra.mrb[0].mxu0 %v187
    %v958 = vpop.f32.mrb[0].mxu0
    %v959 = vadd.f32 %v792, %v958
    %v960 = vpop.f32.mrb[0].mxu0
    %v961 = vadd.f32 %v794, %v960
    %962 = vmatprep.mubr.f32.mxu0 %v195
    %963 = vmatmul.mubr.f32.gmra.mrb[0].mxu0 %v194
    %v964 = vpop.f32.mrb[0].mxu0
    %v965 = vadd.f32 %v798, %v964
    %v966 = vpop.f32.mrb[0].mxu0
    %v967 = vadd.f32 %v800, %v966
    %968 = vmatprep.mubr.f32.mxu0 %v202
    %969 = vmatmul.mubr.f32.gmra.mrb[0].mxu0 %v201
    %v970 = vpop.f32.mrb[0].mxu0
    %v971 = vadd.f32 %v804, %v970
    %v972 = vpop.f32.mrb[0].mxu0
    %v973 = vadd.f32 %v806, %v972
    %974 = vmatprep.mubr.f32.mxu0 %v209
    %975 = vmatmul.mubr.f32.gmra.mrb[0].mxu0 %v208
    %v976 = vpop.f32.mrb[0].mxu0
    %v977 = vadd.f32 %v810, %v976
    %v978 = vpop.f32.mrb[0].mxu0
    %v979 = vadd.f32 %v812, %v978
    %980 = vmatprep.mubr.f32.mxu0 %v216
    %981 = vmatmul.mubr.f32.gmra.mrb[0].mxu0 %v215
    %v982 = vpop.f32.mrb[0].mxu0
    %v983 = vadd.f32 %v816, %v982
    %v984 = vpop.f32.mrb[0].mxu0
    %v985 = vadd.f32 %v818, %v984
    %986 = vmatprep.mubr.f32.mxu0 %v223
    %987 = vmatmul.mubr.f32.gmra.mrb[0].mxu0 %v222
    %v988 = vpop.f32.mrb[0].mxu0
    %v989 = vadd.f32 %v822, %v988
    %v990 = vpop.f32.mrb[0].mxu0
    %v991 = vadd.f32 %v824, %v990
    %992 = vmatprep.mubr.f32.mxu0 %v230
    %993 = vmatmul.mubr.f32.gmra.mrb[0].mxu0 %v229
    %v994 = vpop.f32.mrb[0].mxu0
    %v995 = vadd.f32 %v828, %v994
    %v996 = vpop.f32.mrb[0].mxu0
    %v997 = vadd.f32 %v830, %v996
    %998 = vmatprep.mubr.f32.mxu0 %v237
    %999 = vmatmul.mubr.f32.gmra.mrb[0].mxu0 %v236
    %v1000 = vpop.f32.mrb[0].mxu0
    %v1001 = vadd.f32 %v834, %v1000
    %v1002 = vpop.f32.mrb[0].mxu0
    %v1003 = vadd.f32 %v836, %v1002
    %1004 = vmatprep.mubr.f32.mxu0 %v244
    %1005 = vmatmul.mubr.f32.gmra.mrb[0].mxu0 %v243
    %v1006 = vpop.f32.mrb[0].mxu0
    %v1007 = vadd.f32 %v840, %v1006
    %v1008 = vpop.f32.mrb[0].mxu0
    %v1009 = vadd.f32 %v842, %v1008
    %1010 = vmatprep.mubr.f32.mxu0 %v251
    %1011 = vmatmul.mubr.f32.gmra.mrb[0].mxu0 %v250
    %v1012 = vpop.f32.mrb[0].mxu0
    %v1013 = vadd.f32 %v846, %v1012
    %v1014 = vpop.f32.mrb[0].mxu0
    %v1015 = vadd.f32 %v848, %v1014
    %1016 = vmatprep.mubr.f32.mxu0 %v258
    %1017 = vmatmul.mubr.f32.gmra.mrb[0].mxu0 %v257
    %v1018 = vpop.f32.mrb[0].mxu0
    %v1019 = vadd.f32 %v852, %v1018
    %v1020 = vpop.f32.mrb[0].mxu0
    %v1021 = vadd.f32 %v854, %v1020
    %1022 = vmatprep.mubr.f32.mxu0 %v265
    %1023 = vmatmul.mubr.f32.gmra.mrb[0].mxu0 %v264
    %v1024 = vpop.f32.mrb[0].mxu0
    %v1025 = vadd.f32 %v858, %v1024
    %v1026 = vpop.f32.mrb[0].mxu0
    %v1027 = vadd.f32 %v860, %v1026
    %1028 = vmatprep.mubr.f32.mxu0 %v272
    %1029 = vmatmul.mubr.f32.gmra.mrb[0].mxu0 %v271
    %v1030 = vpop.f32.mrb[0].mxu0
    %v1031 = vadd.f32 %v864, %v1030
    %v1032 = vpop.f32.mrb[0].mxu0
    %v1033 = vadd.f32 %v866, %v1032
    %1034 = vmatprep.mubr.f32.mxu0 %v279
    %1035 = vmatmul.mubr.f32.gmra.mrb[0].mxu0 %v278
    %v1036 = vpop.f32.mrb[0].mxu0
    %v1037 = vadd.f32 %v870, %v1036
    %v1038 = vpop.f32.mrb[0].mxu0
    %v1039 = vadd.f32 %v872, %v1038
    %1040 = vmatprep.mubr.f32.mxu0 %v286
    %1041 = vmatmul.mubr.f32.gmra.mrb[0].mxu0 %v285
    %v1042 = vpop.f32.mrb[0].mxu0
    %v1043 = vadd.f32 %v876, %v1042
    %v1044 = vpop.f32.mrb[0].mxu0
    %v1045 = vadd.f32 %v878, %v1044
    %1046 = vmatprep.mubr.f32.mxu0 %v293
    %1047 = vmatmul.mubr.f32.gmra.mrb[0].mxu0 %v292
    %v1048 = vpop.f32.mrb[0].mxu0
    %v1049 = vadd.f32 %v882, %v1048
    %v1050 = vpop.f32.mrb[0].mxu0
    %v1051 = vadd.f32 %v884, %v1050
    %1052 = vmatprep.mubr.f32.mxu0 %v300
    %1053 = vmatmul.mubr.f32.gmra.mrb[0].mxu0 %v299
    %v1054 = vpop.f32.mrb[0].mxu0
    %v1055 = vadd.f32 %v888, %v1054
    %v1056 = vpop.f32.mrb[0].mxu0
    %v1057 = vadd.f32 %v890, %v1056
    %1058 = vdwg.mxu0
    %1059 = vmatprep.subr.mxu0 %v495
    %1060 = vmatpush1.msra.mxu0 %v494
    %1061 = vmatprep.subr.mxu0 %v497
    %1062 = vmatpush1.msra.mxu0 %v496
    %1063 = vmatprep.subr.mxu0 %v499
    %1064 = vmatpush1.msra.mxu0 %v498
    %1065 = vmatprep.subr.mxu0 %v501
    %1066 = vmatpush1.msra.mxu0 %v500
    %1067 = vmatprep.subr.mxu0 %v503
    %1068 = vmatpush1.msra.mxu0 %v502
    %1069 = vmatprep.subr.mxu0 %v505
    %1070 = vmatpush1.msra.mxu0 %v504
    %1071 = vmatprep.subr.mxu0 0.0
    %1072 = vmatpush1.msra.mxu0 0.0
    %1073 = vmatprep.subr.mxu0 0.0
    %1074 = vmatpush1.msra.mxu0 0.0
    %1075 = vmatprep.subr.mxu0 0.0
    %1076 = vmatpush1.msra.mxu0 0.0
    %1077 = vmatprep.subr.mxu0 0.0
    %1078 = vmatpush1.msra.mxu0 0.0
    %1079 = vmatprep.subr.mxu0 0.0
    %1080 = vmatpush1.msra.mxu0 0.0
    %1081 = vmatprep.subr.mxu0 0.0
    %1082 = vmatpush1.msra.mxu0 0.0
    %1083 = vmatprep.subr.mxu0 0.0
    %1084 = vmatpush1.msra.mxu0 0.0
    %1085 = vmatprep.subr.mxu0 0.0
    %1086 = vmatpush1.msra.mxu0 0.0
    %1087 = vmatprep.subr.mxu0 0.0
    %1088 = vmatpush1.msra.mxu0 0.0
    %1089 = vmatprep.subr.mxu0 0.0
    %1090 = vmatpush1.msra.mxu0 0.0
    %1091 = vmatprep.subr.mxu0 0.0
    %1092 = vmatpush1.msra.mxu0 0.0
    %1093 = vmatprep.subr.mxu0 0.0
    %1094 = vmatpush1.msra.mxu0 0.0
    %1095 = vmatprep.subr.mxu0 0.0
    %1096 = vmatpush1.msra.mxu0 0.0
    %1097 = vmatprep.subr.mxu0 0.0
    %1098 = vmatpush1.msra.mxu0 0.0
    %1099 = vmatprep.subr.mxu0 0.0
    %1100 = vmatpush1.msra.mxu0 0.0
    %1101 = vmatprep.subr.mxu0 0.0
    %1102 = vmatpush1.msra.mxu0 0.0
    %1103 = vmatprep.subr.mxu0 0.0
    %1104 = vmatpush1.msra.mxu0 0.0
    %1105 = vmatprep.subr.mxu0 0.0
    %1106 = vmatpush1.msra.mxu0 0.0
    %1107 = vmatprep.subr.mxu0 0.0
    %1108 = vmatpush1.msra.mxu0 0.0
    %1109 = vmatprep.subr.mxu0 0.0
    %1110 = vmatpush1.msra.mxu0 0.0
    %1111 = vmatprep.subr.mxu0 0.0
    %1112 = vmatpush1.msra.mxu0 0.0
    %1113 = vmatprep.subr.mxu0 0.0
    %1114 = vmatpush1.msra.mxu0 0.0
    %1115 = vmatprep.subr.mxu0 0.0
    %1116 = vmatpush1.msra.mxu0 0.0
    %1117 = vmatprep.subr.mxu0 0.0
    %1118 = vmatpush1.msra.mxu0 0.0
    %1119 = vmatprep.subr.mxu0 0.0
    %1120 = vmatpush1.msra.mxu0 0.0
    %1121 = vmatprep.subr.mxu0 0.0
    %1122 = vmatpush1.msra.mxu0 0.0
    %1123 = vmatprep.mubr.f32.mxu0 0.0
    %1124 = vmatmul.mubr.f32.gmra.mrb[0].mxu0 %v508
    %v1125 = vpop.f32.mrb[0].mxu0
    %v1126 = vadd.f32 %v959, %v1125
    %v1127 = vpop.f32.mrb[0].mxu0
    %v1128 = vadd.f32 %v961, %v1127
    %1129 = vmatprep.mubr.f32.mxu0 0.0
    %1130 = vmatmul.mubr.f32.gmra.mrb[0].mxu0 %v511
    %v1131 = vpop.f32.mrb[0].mxu0
    %v1132 = vadd.f32 %v965, %v1131
    %v1133 = vpop.f32.mrb[0].mxu0
    %v1134 = vadd.f32 %v967, %v1133
    %1135 = vmatprep.mubr.f32.mxu0 0.0
    %1136 = vmatmul.mubr.f32.gmra.mrb[0].mxu0 %v514
    %v1137 = vpop.f32.mrb[0].mxu0
    %v1138 = vadd.f32 %v971, %v1137
    %v1139 = vpop.f32.mrb[0].mxu0
    %v1140 = vadd.f32 %v973, %v1139
    %1141 = vmatprep.mubr.f32.mxu0 0.0
    %1142 = vmatmul.mubr.f32.gmra.mrb[0].mxu0 %v517
    %v1143 = vpop.f32.mrb[0].mxu0
    %v1144 = vadd.f32 %v977, %v1143
    %v1145 = vpop.f32.mrb[0].mxu0
    %v1146 = vadd.f32 %v979, %v1145
    %1147 = vmatprep.mubr.f32.mxu0 0.0
    %1148 = vmatmul.mubr.f32.gmra.mrb[0].mxu0 %v520
    %v1149 = vpop.f32.mrb[0].mxu0
    %v1150 = vadd.f32 %v983, %v1149
    %v1151 = vpop.f32.mrb[0].mxu0
    %v1152 = vadd.f32 %v985, %v1151
    %1153 = vmatprep.mubr.f32.mxu0 0.0
    %1154 = vmatmul.mubr.f32.gmra.mrb[0].mxu0 %v523
    %v1155 = vpop.f32.mrb[0].mxu0
    %v1156 = vadd.f32 %v989, %v1155
    %v1157 = vpop.f32.mrb[0].mxu0
    %v1158 = vadd.f32 %v991, %v1157
    %1159 = vmatprep.mubr.f32.mxu0 0.0
    %1160 = vmatmul.mubr.f32.gmra.mrb[0].mxu0 %v526
    %v1161 = vpop.f32.mrb[0].mxu0
    %v1162 = vadd.f32 %v995, %v1161
    %v1163 = vpop.f32.mrb[0].mxu0
    %v1164 = vadd.f32 %v997, %v1163
    %1165 = vmatprep.mubr.f32.mxu0 0.0
    %1166 = vmatmul.mubr.f32.gmra.mrb[0].mxu0 %v529
    %v1167 = vpop.f32.mrb[0].mxu0
    %v1168 = vadd.f32 %v1001, %v1167
    %v1169 = vpop.f32.mrb[0].mxu0
    %v1170 = vadd.f32 %v1003, %v1169
    %1171 = vmatprep.mubr.f32.mxu0 0.0
    %1172 = vmatmul.mubr.f32.gmra.mrb[0].mxu0 %v532
    %v1173 = vpop.f32.mrb[0].mxu0
    %v1174 = vadd.f32 %v1007, %v1173
    %v1175 = vpop.f32.mrb[0].mxu0
    %v1176 = vadd.f32 %v1009, %v1175
    %1177 = vmatprep.mubr.f32.mxu0 0.0
    %1178 = vmatmul.mubr.f32.gmra.mrb[0].mxu0 %v535
    %v1179 = vpop.f32.mrb[0].mxu0
    %v1180 = vadd.f32 %v1013, %v1179
    %v1181 = vpop.f32.mrb[0].mxu0
    %v1182 = vadd.f32 %v1015, %v1181
    %1183 = vmatprep.mubr.f32.mxu0 0.0
    %1184 = vmatmul.mubr.f32.gmra.mrb[0].mxu0 %v538
    %v1185 = vpop.f32.mrb[0].mxu0
    %v1186 = vadd.f32 %v1019, %v1185
    %v1187 = vpop.f32.mrb[0].mxu0
    %v1188 = vadd.f32 %v1021, %v1187
    %1189 = vmatprep.mubr.f32.mxu0 0.0
    %1190 = vmatmul.mubr.f32.gmra.mrb[0].mxu0 %v541
    %v1191 = vpop.f32.mrb[0].mxu0
    %v1192 = vadd.f32 %v1025, %v1191
    %v1193 = vpop.f32.mrb[0].mxu0
    %v1194 = vadd.f32 %v1027, %v1193
    %1195 = vmatprep.mubr.f32.mxu0 0.0
    %1196 = vmatmul.mubr.f32.gmra.mrb[0].mxu0 %v544
    %v1197 = vpop.f32.mrb[0].mxu0
    %v1198 = vadd.f32 %v1031, %v1197
    %v1199 = vpop.f32.mrb[0].mxu0
    %v1200 = vadd.f32 %v1033, %v1199
    %1201 = vmatprep.mubr.f32.mxu0 0.0
    %1202 = vmatmul.mubr.f32.gmra.mrb[0].mxu0 %v547
    %v1203 = vpop.f32.mrb[0].mxu0
    %v1204 = vadd.f32 %v1037, %v1203
    %v1205 = vpop.f32.mrb[0].mxu0
    %v1206 = vadd.f32 %v1039, %v1205
    %1207 = vmatprep.mubr.f32.mxu0 0.0
    %1208 = vmatmul.mubr.f32.gmra.mrb[0].mxu0 %v550
    %v1209 = vpop.f32.mrb[0].mxu0
    %v1210 = vadd.f32 %v1043, %v1209
    %v1211 = vpop.f32.mrb[0].mxu0
    %v1212 = vadd.f32 %v1045, %v1211
    %1213 = vmatprep.mubr.f32.mxu0 0.0
    %1214 = vmatmul.mubr.f32.gmra.mrb[0].mxu0 %v553
    %v1215 = vpop.f32.mrb[0].mxu0
    %v1216 = vadd.f32 %v1049, %v1215
    %v1217 = vpop.f32.mrb[0].mxu0
    %v1218 = vadd.f32 %v1051, %v1217
    %1219 = vmatprep.mubr.f32.mxu0 0.0
    %1220 = vmatmul.mubr.f32.gmra.mrb[0].mxu0 %v556
    %v1221 = vpop.f32.mrb[0].mxu0
    %v1222 = vadd.f32 %v1055, %v1221
    %v1223 = vpop.f32.mrb[0].mxu0
    %v1224 = vadd.f32 %v1057, %v1223
    %1225 = vdwg.mxu0
    %vm1226 = vcmask 556032
    %v1227 = vsel %vm1226, %v1128, 0.0
    %v1228 = vadd.f32 %v1126, %v1227
    %1229 = vadd.xlane.f32.xlu0 %v1228
    %v1230 = vpop.xlane.xlu0 %1229
    %v1231 = vsel %vm1226, %v1134, 0.0
    %v1232 = vadd.f32 %v1132, %v1231
    %1233 = vadd.xlane.f32.xlu0 %v1232
    %v1234 = vpop.xlane.xlu0 %1233
    %v1235 = vsel %vm1226, %v1140, 0.0
    %v1236 = vadd.f32 %v1138, %v1235
    %1237 = vadd.xlane.f32.xlu0 %v1236
    %v1238 = vpop.xlane.xlu0 %1237
    %v1239 = vsel %vm1226, %v1146, 0.0
    %v1240 = vadd.f32 %v1144, %v1239
    %1241 = vadd.xlane.f32.xlu0 %v1240
    %v1242 = vpop.xlane.xlu0 %1241
    %v1243 = vsel %vm1226, %v1152, 0.0
    %v1244 = vadd.f32 %v1150, %v1243
    %1245 = vadd.xlane.f32.xlu0 %v1244
    %v1246 = vpop.xlane.xlu0 %1245
    %v1247 = vsel %vm1226, %v1158, 0.0
    %v1248 = vadd.f32 %v1156, %v1247
    %1249 = vadd.xlane.f32.xlu0 %v1248
    %v1250 = vpop.xlane.xlu0 %1249
    %v1251 = vsel %vm1226, %v1164, 0.0
    %v1252 = vadd.f32 %v1162, %v1251
    %1253 = vadd.xlane.f32.xlu0 %v1252
    %v1254 = vpop.xlane.xlu0 %1253
    %v1255 = vsel %vm1226, %v1170, 0.0
    %v1256 = vadd.f32 %v1168, %v1255
    %1257 = vadd.xlane.f32.xlu0 %v1256
    %v1258 = vpop.xlane.xlu0 %1257
    %v1259 = vsel %vm1226, %v1176, 0.0
    %v1260 = vadd.f32 %v1174, %v1259
    %1261 = vadd.xlane.f32.xlu0 %v1260
    %v1262 = vpop.xlane.xlu0 %1261
    %v1263 = vsel %vm1226, %v1182, 0.0
    %v1264 = vadd.f32 %v1180, %v1263
    %1265 = vadd.xlane.f32.xlu0 %v1264
    %v1266 = vpop.xlane.xlu0 %1265
    %v1267 = vsel %vm1226, %v1188, 0.0
    %v1268 = vadd.f32 %v1186, %v1267
    %1269 = vadd.xlane.f32.xlu0 %v1268
    %v1270 = vpop.xlane.xlu0 %1269
    %v1271 = vsel %vm1226, %v1194, 0.0
    %v1272 = vadd.f32 %v1192, %v1271
    %1273 = vadd.xlane.f32.xlu0 %v1272
    %v1274 = vpop.xlane.xlu0 %1273
    %v1275 = vsel %vm1226, %v1200, 0.0
    %v1276 = vadd.f32 %v1198, %v1275
    %1277 = vadd.xlane.f32.xlu0 %v1276
    %v1278 = vpop.xlane.xlu0 %1277
    %v1279 = vsel %vm1226, %v1206, 0.0
    %v1280 = vadd.f32 %v1204, %v1279
    %1281 = vadd.xlane.f32.xlu0 %v1280
    %v1282 = vpop.xlane.xlu0 %1281
    %v1283 = vsel %vm1226, %v1212, 0.0
    %v1284 = vadd.f32 %v1210, %v1283
    %1285 = vadd.xlane.f32.xlu0 %v1284
    %v1286 = vpop.xlane.xlu0 %1285
    %v1287 = vsel %vm1226, %v1218, 0.0
    %v1288 = vadd.f32 %v1216, %v1287
    %1289 = vadd.xlane.f32.xlu0 %v1288
    %v1290 = vpop.xlane.xlu0 %1289
    %v1291 = vsel %vm1226, %v1224, 0.0
    %v1292 = vadd.f32 %v1222, %v1291
    %1293 = vadd.xlane.f32.xlu0 %v1292
    %v1294 = vpop.xlane.xlu0 %1293
    %v1295 = vmul.f32 %v1230, 0.0051020407
    %v1296 = vmul.f32 %v1234, 0.0051020407
    %v1297 = vmul.f32 %v1238, 0.0051020407
    %v1298 = vmul.f32 %v1242, 0.0051020407
    %v1299 = vmul.f32 %v1246, 0.0051020407
    %v1300 = vmul.f32 %v1250, 0.0051020407
    %v1301 = vmul.f32 %v1254, 0.0051020407
    %v1302 = vmul.f32 %v1258, 0.0051020407
    %v1303 = vmul.f32 %v1262, 0.0051020407
    %v1304 = vmul.f32 %v1266, 0.0051020407
    %v1305 = vmul.f32 %v1270, 0.0051020407
    %v1306 = vmul.f32 %v1274, 0.0051020407
    %v1307 = vmul.f32 %v1278, 0.0051020407
    %v1308 = vmul.f32 %v1282, 0.0051020407
    %v1309 = vmul.f32 %v1286, 0.0051020407
    %v1310 = vmul.f32 %v1290, 0.0051020407
    %v1311 = vmul.f32 %v1294, 0.0051020407
    %v1312 = vsub.f32 %v1126, %v1295
    %v1313 = vsub.f32 %v1128, %v1295
    %v1314 = vsub.f32 %v1132, %v1296
    %v1315 = vsub.f32 %v1134, %v1296
    %v1316 = vsub.f32 %v1138, %v1297
    %v1317 = vsub.f32 %v1140, %v1297
    %v1318 = vsub.f32 %v1144, %v1298
    %v1319 = vsub.f32 %v1146, %v1298
    %v1320 = vsub.f32 %v1150, %v1299
    %v1321 = vsub.f32 %v1152, %v1299
    %v1322 = vsub.f32 %v1156, %v1300
    %v1323 = vsub.f32 %v1158, %v1300
    %v1324 = vsub.f32 %v1162, %v1301
    %v1325 = vsub.f32 %v1164, %v1301
    %v1326 = vsub.f32 %v1168, %v1302
    %v1327 = vsub.f32 %v1170, %v1302
    %v1328 = vsub.f32 %v1174, %v1303
    %v1329 = vsub.f32 %v1176, %v1303
    %v1330 = vsub.f32 %v1180, %v1304
    %v1331 = vsub.f32 %v1182, %v1304
    %v1332 = vsub.f32 %v1186, %v1305
    %v1333 = vsub.f32 %v1188, %v1305
    %v1334 = vsub.f32 %v1192, %v1306
    %v1335 = vsub.f32 %v1194, %v1306
    %v1336 = vsub.f32 %v1198, %v1307
    %v1337 = vsub.f32 %v1200, %v1307
    %v1338 = vsub.f32 %v1204, %v1308
    %v1339 = vsub.f32 %v1206, %v1308
    %v1340 = vsub.f32 %v1210, %v1309
    %v1341 = vsub.f32 %v1212, %v1309
    %v1342 = vsub.f32 %v1216, %v1310
    %v1343 = vsub.f32 %v1218, %v1310
    %v1344 = vsub.f32 %v1222, %v1311
    %v1345 = vsub.f32 %v1224, %v1311
    %v1346 = vmul.f32 %v1312, %v1312
    %v1347 = vmul.f32 %v1313, %v1313
    %v1348 = vmul.f32 %v1314, %v1314
    %v1349 = vmul.f32 %v1315, %v1315
    %v1350 = vmul.f32 %v1316, %v1316
    %v1351 = vmul.f32 %v1317, %v1317
    %v1352 = vmul.f32 %v1318, %v1318
    %v1353 = vmul.f32 %v1319, %v1319
    %v1354 = vmul.f32 %v1320, %v1320
    %v1355 = vmul.f32 %v1321, %v1321
    %v1356 = vmul.f32 %v1322, %v1322
    %v1357 = vmul.f32 %v1323, %v1323
    %v1358 = vmul.f32 %v1324, %v1324
    %v1359 = vmul.f32 %v1325, %v1325
    %v1360 = vmul.f32 %v1326, %v1326
    %v1361 = vmul.f32 %v1327, %v1327
    %v1362 = vmul.f32 %v1328, %v1328
    %v1363 = vmul.f32 %v1329, %v1329
    %v1364 = vmul.f32 %v1330, %v1330
    %v1365 = vmul.f32 %v1331, %v1331
    %v1366 = vmul.f32 %v1332, %v1332
    %v1367 = vmul.f32 %v1333, %v1333
    %v1368 = vmul.f32 %v1334, %v1334
    %v1369 = vmul.f32 %v1335, %v1335
    %v1370 = vmul.f32 %v1336, %v1336
    %v1371 = vmul.f32 %v1337, %v1337
    %v1372 = vmul.f32 %v1338, %v1338
    %v1373 = vmul.f32 %v1339, %v1339
    %v1374 = vmul.f32 %v1340, %v1340
    %v1375 = vmul.f32 %v1341, %v1341
    %v1376 = vmul.f32 %v1342, %v1342
    %v1377 = vmul.f32 %v1343, %v1343
    %v1378 = vmul.f32 %v1344, %v1344
    %v1379 = vmul.f32 %v1345, %v1345
    %v1380 = vsel %vm1226, %v1347, 0.0
    %v1381 = vadd.f32 %v1346, %v1380
    %1382 = vadd.xlane.f32.xlu0 %v1381
    %v1383 = vpop.xlane.xlu0 %1382
    %v1384 = vsel %vm1226, %v1349, 0.0
    %v1385 = vadd.f32 %v1348, %v1384
    %1386 = vadd.xlane.f32.xlu0 %v1385
    %v1387 = vpop.xlane.xlu0 %1386
    %v1388 = vsel %vm1226, %v1351, 0.0
    %v1389 = vadd.f32 %v1350, %v1388
    %1390 = vadd.xlane.f32.xlu0 %v1389
    %v1391 = vpop.xlane.xlu0 %1390
    %v1392 = vsel %vm1226, %v1353, 0.0
    %v1393 = vadd.f32 %v1352, %v1392
    %1394 = vadd.xlane.f32.xlu0 %v1393
    %v1395 = vpop.xlane.xlu0 %1394
    %v1396 = vsel %vm1226, %v1355, 0.0
    %v1397 = vadd.f32 %v1354, %v1396
    %1398 = vadd.xlane.f32.xlu0 %v1397
    %v1399 = vpop.xlane.xlu0 %1398
    %v1400 = vsel %vm1226, %v1357, 0.0
    %v1401 = vadd.f32 %v1356, %v1400
    %1402 = vadd.xlane.f32.xlu0 %v1401
    %v1403 = vpop.xlane.xlu0 %1402
    %v1404 = vsel %vm1226, %v1359, 0.0
    %v1405 = vadd.f32 %v1358, %v1404
    %1406 = vadd.xlane.f32.xlu0 %v1405
    %v1407 = vpop.xlane.xlu0 %1406
    %v1408 = vsel %vm1226, %v1361, 0.0
    %v1409 = vadd.f32 %v1360, %v1408
    %1410 = vadd.xlane.f32.xlu0 %v1409
    %v1411 = vpop.xlane.xlu0 %1410
    %v1412 = vsel %vm1226, %v1363, 0.0
    %v1413 = vadd.f32 %v1362, %v1412
    %1414 = vadd.xlane.f32.xlu0 %v1413
    %v1415 = vpop.xlane.xlu0 %1414
    %v1416 = vsel %vm1226, %v1365, 0.0
    %v1417 = vadd.f32 %v1364, %v1416
    %1418 = vadd.xlane.f32.xlu0 %v1417
    %v1419 = vpop.xlane.xlu0 %1418
    %v1420 = vsel %vm1226, %v1367, 0.0
    %v1421 = vadd.f32 %v1366, %v1420
    %1422 = vadd.xlane.f32.xlu0 %v1421
    %v1423 = vpop.xlane.xlu0 %1422
    %v1424 = vsel %vm1226, %v1369, 0.0
    %v1425 = vadd.f32 %v1368, %v1424
    %1426 = vadd.xlane.f32.xlu0 %v1425
    %v1427 = vpop.xlane.xlu0 %1426
    %v1428 = vsel %vm1226, %v1371, 0.0
    %v1429 = vadd.f32 %v1370, %v1428
    %1430 = vadd.xlane.f32.xlu0 %v1429
    %v1431 = vpop.xlane.xlu0 %1430
    %v1432 = vsel %vm1226, %v1373, 0.0
    %v1433 = vadd.f32 %v1372, %v1432
    %1434 = vadd.xlane.f32.xlu0 %v1433
    %v1435 = vpop.xlane.xlu0 %1434
    %v1436 = vsel %vm1226, %v1375, 0.0
    %v1437 = vadd.f32 %v1374, %v1436
    %1438 = vadd.xlane.f32.xlu0 %v1437
    %v1439 = vpop.xlane.xlu0 %1438
    %v1440 = vsel %vm1226, %v1377, 0.0
    %v1441 = vadd.f32 %v1376, %v1440
    %1442 = vadd.xlane.f32.xlu0 %v1441
    %v1443 = vpop.xlane.xlu0 %1442
    %v1444 = vsel %vm1226, %v1379, 0.0
    %v1445 = vadd.f32 %v1378, %v1444
    %1446 = vadd.xlane.f32.xlu0 %v1445
    %v1447 = vpop.xlane.xlu0 %1446
    %v1448 = vmul.f32 %v1383, 0.0051020407
    %v1449 = vmul.f32 %v1387, 0.0051020407
    %v1450 = vmul.f32 %v1391, 0.0051020407
    %v1451 = vmul.f32 %v1395, 0.0051020407
    %v1452 = vmul.f32 %v1399, 0.0051020407
    %v1453 = vmul.f32 %v1403, 0.0051020407
    %v1454 = vmul.f32 %v1407, 0.0051020407
    %v1455 = vmul.f32 %v1411, 0.0051020407
    %v1456 = vmul.f32 %v1415, 0.0051020407
    %v1457 = vmul.f32 %v1419, 0.0051020407
    %v1458 = vmul.f32 %v1423, 0.0051020407
    %v1459 = vmul.f32 %v1427, 0.0051020407
    %v1460 = vmul.f32 %v1431, 0.0051020407
    %v1461 = vmul.f32 %v1435, 0.0051020407
    %v1462 = vmul.f32 %v1439, 0.0051020407
    %v1463 = vmul.f32 %v1443, 0.0051020407
    %v1464 = vmul.f32 %v1447, 0.0051020407
    %v1465 = vld [vmem:[%s3] sm:$0xff]
    %v1466 = vld [vmem:[%s3 + $0x8] sm:$0xff]
    %v1467 = vld [vmem:[%s3 + $0x10] sm:$0xff]
    %v1468 = vld [vmem:[%s3 + $0x18] sm:$0xff]
    %v1469 = vld [vmem:[%s3 + $0x20] sm:$0xff]
    %v1470 = vld [vmem:[%s3 + $0x28] sm:$0xff]
    %v1471 = vld [vmem:[%s3 + $0x30] sm:$0xff]
    %v1472 = vld [vmem:[%s3 + $0x38] sm:$0xff]
    %v1473 = vld [vmem:[%s3 + $0x40] sm:$0xff]
    %v1474 = vld [vmem:[%s3 + $0x48] sm:$0xff]
    %v1475 = vld [vmem:[%s3 + $0x50] sm:$0xff]
    %v1476 = vld [vmem:[%s3 + $0x58] sm:$0xff]
    %v1477 = vld [vmem:[%s3 + $0x60] sm:$0xff]
    %v1478 = vld [vmem:[%s3 + $0x68] sm:$0xff]
    %v1479 = vld [vmem:[%s3 + $0x70] sm:$0xff]
    %v1480 = vld [vmem:[%s3 + $0x78] sm:$0xff]
    %v1481 = vld [vmem:[%s3 + $0x80] sm:$0xff]
    %v1482 = vadd.f32 %v1448, 1e-05
    %v1483 = vadd.f32 %v1449, 1e-05
    %v1484 = vadd.f32 %v1450, 1e-05
    %v1485 = vadd.f32 %v1451, 1e-05
    %v1486 = vadd.f32 %v1452, 1e-05
    %v1487 = vadd.f32 %v1453, 1e-05
    %v1488 = vadd.f32 %v1454, 1e-05
    %v1489 = vadd.f32 %v1455, 1e-05
    %v1490 = vadd.f32 %v1456, 1e-05
    %v1491 = vadd.f32 %v1457, 1e-05
    %v1492 = vadd.f32 %v1458, 1e-05
    %v1493 = vadd.f32 %v1459, 1e-05
    %v1494 = vadd.f32 %v1460, 1e-05
    %v1495 = vadd.f32 %v1461, 1e-05
    %v1496 = vadd.f32 %v1462, 1e-05
    %v1497 = vadd.f32 %v1463, 1e-05
    %v1498 = vadd.f32 %v1464, 1e-05
    %v1499 = vrsqrt.pop %v1482
    %v1500 = vrsqrt.pop %v1483
    %v1501 = vrsqrt.pop %v1484
    %v1502 = vrsqrt.pop %v1485
    %v1503 = vrsqrt.pop %v1486
    %v1504 = vrsqrt.pop %v1487
    %v1505 = vrsqrt.pop %v1488
    %v1506 = vrsqrt.pop %v1489
    %v1507 = vrsqrt.pop %v1490
    %v1508 = vrsqrt.pop %v1491
    %v1509 = vrsqrt.pop %v1492
    %v1510 = vrsqrt.pop %v1493
    %v1511 = vrsqrt.pop %v1494
    %v1512 = vrsqrt.pop %v1495
    %v1513 = vrsqrt.pop %v1496
    %v1514 = vrsqrt.pop %v1497
    %v1515 = vrsqrt.pop %v1498
    %v1516 = vmul.f32 %v1465, %v1499
    %v1517 = vmul.f32 %v1466, %v1500
    %v1518 = vmul.f32 %v1467, %v1501
    %v1519 = vmul.f32 %v1468, %v1502
    %v1520 = vmul.f32 %v1469, %v1503
    %v1521 = vmul.f32 %v1470, %v1504
    %v1522 = vmul.f32 %v1471, %v1505
    %v1523 = vmul.f32 %v1472, %v1506
    %v1524 = vmul.f32 %v1473, %v1507
    %v1525 = vmul.f32 %v1474, %v1508
    %v1526 = vmul.f32 %v1475, %v1509
    %v1527 = vmul.f32 %v1476, %v1510
    %v1528 = vmul.f32 %v1477, %v1511
    %v1529 = vmul.f32 %v1478, %v1512
    %v1530 = vmul.f32 %v1479, %v1513
    %v1531 = vmul.f32 %v1480, %v1514
    %v1532 = vmul.f32 %v1481, %v1515
    %v1533 = vld [vmem:[%s4] sm:$0xff]
    %v1534 = vld [vmem:[%s4 + $0x8] sm:$0xff]
    %v1535 = vld [vmem:[%s4 + $0x10] sm:$0xff]
    %v1536 = vld [vmem:[%s4 + $0x18] sm:$0xff]
    %v1537 = vld [vmem:[%s4 + $0x20] sm:$0xff]
    %v1538 = vld [vmem:[%s4 + $0x28] sm:$0xff]
    %v1539 = vld [vmem:[%s4 + $0x30] sm:$0xff]
    %v1540 = vld [vmem:[%s4 + $0x38] sm:$0xff]
    %v1541 = vld [vmem:[%s4 + $0x40] sm:$0xff]
    %v1542 = vld [vmem:[%s4 + $0x48] sm:$0xff]
    %v1543 = vld [vmem:[%s4 + $0x50] sm:$0xff]
    %v1544 = vld [vmem:[%s4 + $0x58] sm:$0xff]
    %v1545 = vld [vmem:[%s4 + $0x60] sm:$0xff]
    %v1546 = vld [vmem:[%s4 + $0x68] sm:$0xff]
    %v1547 = vld [vmem:[%s4 + $0x70] sm:$0xff]
    %v1548 = vld [vmem:[%s4 + $0x78] sm:$0xff]
    %v1549 = vld [vmem:[%s4 + $0x80] sm:$0xff]
    %v1550 = vmul.f32 %v1295, %v1516
    %v1551 = vmul.f32 %v1296, %v1517
    %v1552 = vmul.f32 %v1297, %v1518
    %v1553 = vmul.f32 %v1298, %v1519
    %v1554 = vmul.f32 %v1299, %v1520
    %v1555 = vmul.f32 %v1300, %v1521
    %v1556 = vmul.f32 %v1301, %v1522
    %v1557 = vmul.f32 %v1302, %v1523
    %v1558 = vmul.f32 %v1303, %v1524
    %v1559 = vmul.f32 %v1304, %v1525
    %v1560 = vmul.f32 %v1305, %v1526
    %v1561 = vmul.f32 %v1306, %v1527
    %v1562 = vmul.f32 %v1307, %v1528
    %v1563 = vmul.f32 %v1308, %v1529
    %v1564 = vmul.f32 %v1309, %v1530
    %v1565 = vmul.f32 %v1310, %v1531
    %v1566 = vmul.f32 %v1311, %v1532
    %v1567 = vsub.f32 %v1533, %v1550
    %v1568 = vsub.f32 %v1534, %v1551
    %v1569 = vsub.f32 %v1535, %v1552
    %v1570 = vsub.f32 %v1536, %v1553
    %v1571 = vsub.f32 %v1537, %v1554
    %v1572 = vsub.f32 %v1538, %v1555
    %v1573 = vsub.f32 %v1539, %v1556
    %v1574 = vsub.f32 %v1540, %v1557
    %v1575 = vsub.f32 %v1541, %v1558
    %v1576 = vsub.f32 %v1542, %v1559
    %v1577 = vsub.f32 %v1543, %v1560
    %v1578 = vsub.f32 %v1544, %v1561
    %v1579 = vsub.f32 %v1545, %v1562
    %v1580 = vsub.f32 %v1546, %v1563
    %v1581 = vsub.f32 %v1547, %v1564
    %v1582 = vsub.f32 %v1548, %v1565
    %v1583 = vsub.f32 %v1549, %v1566
    %1585 = vset.pattern.permute.xlu0 0
    %1586 = vperm.xlu0 %1585, %v1516
    %v1587 = vpop.permute.xlu0 %1586
    %1590 = vset.pattern.permute.xlu0 0
    %1591 = vperm.xlu0 %1590, %v1517
    %v1592 = vpop.permute.xlu0 %1591
    %1595 = vset.pattern.permute.xlu0 0
    %1596 = vperm.xlu0 %1595, %v1518
    %v1597 = vpop.permute.xlu0 %1596
    %1600 = vset.pattern.permute.xlu0 0
    %1601 = vperm.xlu0 %1600, %v1519
    %v1602 = vpop.permute.xlu0 %1601
    %1605 = vset.pattern.permute.xlu0 0
    %1606 = vperm.xlu0 %1605, %v1520
    %v1607 = vpop.permute.xlu0 %1606
    %1610 = vset.pattern.permute.xlu0 0
    %1611 = vperm.xlu0 %1610, %v1521
    %v1612 = vpop.permute.xlu0 %1611
    %1615 = vset.pattern.permute.xlu0 0
    %1616 = vperm.xlu0 %1615, %v1522
    %v1617 = vpop.permute.xlu0 %1616
    %1620 = vset.pattern.permute.xlu0 0
    %1621 = vperm.xlu0 %1620, %v1523
    %v1622 = vpop.permute.xlu0 %1621
    %1625 = vset.pattern.permute.xlu0 0
    %1626 = vperm.xlu0 %1625, %v1524
    %v1627 = vpop.permute.xlu0 %1626
    %1630 = vset.pattern.permute.xlu0 0
    %1631 = vperm.xlu0 %1630, %v1525
    %v1632 = vpop.permute.xlu0 %1631
    %1635 = vset.pattern.permute.xlu0 0
    %1636 = vperm.xlu0 %1635, %v1526
    %v1637 = vpop.permute.xlu0 %1636
    %1640 = vset.pattern.permute.xlu0 0
    %1641 = vperm.xlu0 %1640, %v1527
    %v1642 = vpop.permute.xlu0 %1641
    %1645 = vset.pattern.permute.xlu0 0
    %1646 = vperm.xlu0 %1645, %v1528
    %v1647 = vpop.permute.xlu0 %1646
    %1650 = vset.pattern.permute.xlu0 0
    %1651 = vperm.xlu0 %1650, %v1529
    %v1652 = vpop.permute.xlu0 %1651
    %1655 = vset.pattern.permute.xlu0 0
    %1656 = vperm.xlu0 %1655, %v1530
    %v1657 = vpop.permute.xlu0 %1656
    %1660 = vset.pattern.permute.xlu0 0
    %1661 = vperm.xlu0 %1660, %v1531
    %v1662 = vpop.permute.xlu0 %1661
    %1665 = vset.pattern.permute.xlu0 0
    %1666 = vperm.xlu0 %1665, %v1532
    %v1667 = vpop.permute.xlu0 %1666
    %v1669 = vmul.f32 %v1126, %v1587
    %v1670 = vmul.f32 %v1128, %v1587
    %v1671 = vmul.f32 %v1132, %v1592
    %v1672 = vmul.f32 %v1134, %v1592
    %v1673 = vmul.f32 %v1138, %v1597
    %v1674 = vmul.f32 %v1140, %v1597
    %v1675 = vmul.f32 %v1144, %v1602
    %v1676 = vmul.f32 %v1146, %v1602
    %v1677 = vmul.f32 %v1150, %v1607
    %v1678 = vmul.f32 %v1152, %v1607
    %v1679 = vmul.f32 %v1156, %v1612
    %v1680 = vmul.f32 %v1158, %v1612
    %v1681 = vmul.f32 %v1162, %v1617
    %v1682 = vmul.f32 %v1164, %v1617
    %v1683 = vmul.f32 %v1168, %v1622
    %v1684 = vmul.f32 %v1170, %v1622
    %v1685 = vmul.f32 %v1174, %v1627
    %v1686 = vmul.f32 %v1176, %v1627
    %v1687 = vmul.f32 %v1180, %v1632
    %v1688 = vmul.f32 %v1182, %v1632
    %v1689 = vmul.f32 %v1186, %v1637
    %v1690 = vmul.f32 %v1188, %v1637
    %v1691 = vmul.f32 %v1192, %v1642
    %v1692 = vmul.f32 %v1194, %v1642
    %v1693 = vmul.f32 %v1198, %v1647
    %v1694 = vmul.f32 %v1200, %v1647
    %v1695 = vmul.f32 %v1204, %v1652
    %v1696 = vmul.f32 %v1206, %v1652
    %v1697 = vmul.f32 %v1210, %v1657
    %v1698 = vmul.f32 %v1212, %v1657
    %v1699 = vmul.f32 %v1216, %v1662
    %v1700 = vmul.f32 %v1218, %v1662
    %v1701 = vmul.f32 %v1222, %v1667
    %v1702 = vmul.f32 %v1224, %v1667
    %1704 = vset.pattern.permute.xlu0 0
    %1705 = vperm.xlu0 %1704, %v1567
    %v1706 = vpop.permute.xlu0 %1705
    %1709 = vset.pattern.permute.xlu0 0
    %1710 = vperm.xlu0 %1709, %v1568
    %v1711 = vpop.permute.xlu0 %1710
    %1714 = vset.pattern.permute.xlu0 0
    %1715 = vperm.xlu0 %1714, %v1569
    %v1716 = vpop.permute.xlu0 %1715
    %1719 = vset.pattern.permute.xlu0 0
    %1720 = vperm.xlu0 %1719, %v1570
    %v1721 = vpop.permute.xlu0 %1720
    %1724 = vset.pattern.permute.xlu0 0
    %1725 = vperm.xlu0 %1724, %v1571
    %v1726 = vpop.permute.xlu0 %1725
    %1729 = vset.pattern.permute.xlu0 0
    %1730 = vperm.xlu0 %1729, %v1572
    %v1731 = vpop.permute.xlu0 %1730
    %1734 = vset.pattern.permute.xlu0 0
    %1735 = vperm.xlu0 %1734, %v1573
    %v1736 = vpop.permute.xlu0 %1735
    %1739 = vset.pattern.permute.xlu0 0
    %1740 = vperm.xlu0 %1739, %v1574
    %v1741 = vpop.permute.xlu0 %1740
    %1744 = vset.pattern.permute.xlu0 0
    %1745 = vperm.xlu0 %1744, %v1575
    %v1746 = vpop.permute.xlu0 %1745
    %1749 = vset.pattern.permute.xlu0 0
    %1750 = vperm.xlu0 %1749, %v1576
    %v1751 = vpop.permute.xlu0 %1750
    %1754 = vset.pattern.permute.xlu0 0
    %1755 = vperm.xlu0 %1754, %v1577
    %v1756 = vpop.permute.xlu0 %1755
    %1759 = vset.pattern.permute.xlu0 0
    %1760 = vperm.xlu0 %1759, %v1578
    %v1761 = vpop.permute.xlu0 %1760
    %1764 = vset.pattern.permute.xlu0 0
    %1765 = vperm.xlu0 %1764, %v1579
    %v1766 = vpop.permute.xlu0 %1765
    %1769 = vset.pattern.permute.xlu0 0
    %1770 = vperm.xlu0 %1769, %v1580
    %v1771 = vpop.permute.xlu0 %1770
    %1774 = vset.pattern.permute.xlu0 0
    %1775 = vperm.xlu0 %1774, %v1581
    %v1776 = vpop.permute.xlu0 %1775
    %1779 = vset.pattern.permute.xlu0 0
    %1780 = vperm.xlu0 %1779, %v1582
    %v1781 = vpop.permute.xlu0 %1780
    %1784 = vset.pattern.permute.xlu0 0
    %1785 = vperm.xlu0 %1784, %v1583
    %v1786 = vpop.permute.xlu0 %1785
    %v1788 = vadd.f32 %v1669, %v1706
    %v1789 = vadd.f32 %v1670, %v1706
    %v1790 = vadd.f32 %v1671, %v1711
    %v1791 = vadd.f32 %v1672, %v1711
    %v1792 = vadd.f32 %v1673, %v1716
    %v1793 = vadd.f32 %v1674, %v1716
    %v1794 = vadd.f32 %v1675, %v1721
    %v1795 = vadd.f32 %v1676, %v1721
    %v1796 = vadd.f32 %v1677, %v1726
    %v1797 = vadd.f32 %v1678, %v1726
    %v1798 = vadd.f32 %v1679, %v1731
    %v1799 = vadd.f32 %v1680, %v1731
    %v1800 = vadd.f32 %v1681, %v1736
    %v1801 = vadd.f32 %v1682, %v1736
    %v1802 = vadd.f32 %v1683, %v1741
    %v1803 = vadd.f32 %v1684, %v1741
    %v1804 = vadd.f32 %v1685, %v1746
    %v1805 = vadd.f32 %v1686, %v1746
    %v1806 = vadd.f32 %v1687, %v1751
    %v1807 = vadd.f32 %v1688, %v1751
    %v1808 = vadd.f32 %v1689, %v1756
    %v1809 = vadd.f32 %v1690, %v1756
    %v1810 = vadd.f32 %v1691, %v1761
    %v1811 = vadd.f32 %v1692, %v1761
    %v1812 = vadd.f32 %v1693, %v1766
    %v1813 = vadd.f32 %v1694, %v1766
    %v1814 = vadd.f32 %v1695, %v1771
    %v1815 = vadd.f32 %v1696, %v1771
    %v1816 = vadd.f32 %v1697, %v1776
    %v1817 = vadd.f32 %v1698, %v1776
    %v1818 = vadd.f32 %v1699, %v1781
    %v1819 = vadd.f32 %v1700, %v1781
    %v1820 = vadd.f32 %v1701, %v1786
    %v1821 = vadd.f32 %v1702, %v1786
    %1822 = vst [vmem:[#allocation2] sm:$0xff] %v1788
    %1823 = vst.msk [vmem:[#allocation2 + $0x8] sm:$0xff] %vm1226, %v1789
    %1824 = vst [vmem:[#allocation2 + $0x10] sm:$0xff] %v1790
    %1825 = vst.msk [vmem:[#allocation2 + $0x18] sm:$0xff] %vm1226, %v1791
    %1826 = vst [vmem:[#allocation2 + $0x20] sm:$0xff] %v1792
    %1827 = vst.msk [vmem:[#allocation2 + $0x28] sm:$0xff] %vm1226, %v1793
    %1828 = vst [vmem:[#allocation2 + $0x30] sm:$0xff] %v1794
    %1829 = vst.msk [vmem:[#allocation2 + $0x38] sm:$0xff] %vm1226, %v1795
    %1830 = vst [vmem:[#allocation2 + $0x40] sm:$0xff] %v1796
    %1831 = vst.msk [vmem:[#allocation2 + $0x48] sm:$0xff] %vm1226, %v1797
    %1832 = vst [vmem:[#allocation2 + $0x50] sm:$0xff] %v1798
    %1833 = vst.msk [vmem:[#allocation2 + $0x58] sm:$0xff] %vm1226, %v1799
    %1834 = vst [vmem:[#allocation2 + $0x60] sm:$0xff] %v1800
    %1835 = vst.msk [vmem:[#allocation2 + $0x68] sm:$0xff] %vm1226, %v1801
    %1836 = vst [vmem:[#allocation2 + $0x70] sm:$0xff] %v1802
    %1837 = vst.msk [vmem:[#allocation2 + $0x78] sm:$0xff] %vm1226, %v1803
    %1838 = vst [vmem:[#allocation2 + $0x80] sm:$0xff] %v1804
    %1839 = vst.msk [vmem:[#allocation2 + $0x88] sm:$0xff] %vm1226, %v1805
    %1840 = vst [vmem:[#allocation2 + $0x90] sm:$0xff] %v1806
    %1841 = vst.msk [vmem:[#allocation2 + $0x98] sm:$0xff] %vm1226, %v1807
    %1842 = vst [vmem:[#allocation2 + $0xa0] sm:$0xff] %v1808
    %1843 = vst.msk [vmem:[#allocation2 + $0xa8] sm:$0xff] %vm1226, %v1809
    %1844 = vst [vmem:[#allocation2 + $0xb0] sm:$0xff] %v1810
    %1845 = vst.msk [vmem:[#allocation2 + $0xb8] sm:$0xff] %vm1226, %v1811
    %1846 = vst [vmem:[#allocation2 + $0xc0] sm:$0xff] %v1812
    %1847 = vst.msk [vmem:[#allocation2 + $0xc8] sm:$0xff] %vm1226, %v1813
    %1848 = vst [vmem:[#allocation2 + $0xd0] sm:$0xff] %v1814
    %1849 = vst.msk [vmem:[#allocation2 + $0xd8] sm:$0xff] %vm1226, %v1815
    %1850 = vst [vmem:[#allocation2 + $0xe0] sm:$0xff] %v1816
    %1851 = vst.msk [vmem:[#allocation2 + $0xe8] sm:$0xff] %vm1226, %v1817
    %1852 = vst [vmem:[#allocation2 + $0xf0] sm:$0xff] %v1818
    %1853 = vst.msk [vmem:[#allocation2 + $0xf8] sm:$0xff] %vm1226, %v1819
    %1854 = vst [vmem:[#allocation2 + $0x100] sm:$0xff] %v1820
    %1855 = vst.msk [vmem:[#allocation2 + $0x108] sm:$0xff] %vm1226, %v1821
    // Predicated region
    $region22: #{tpu_custom_call.1} parent=1 // pred_check
      _
    $region23: #{tpu_custom_call.1} parent=1 // pred_check_branch
      %1857 = sbr.rel (0) target = $region25
    $region24: #{tpu_custom_call.1} parent=1 // pred_region
      %s1859 = ssub.s32 4352, 4352
      %1860 = vsyncadd [#allocation3], %s1859
      %s1861 = sshll.u32 [#allocation2], 4
      %s1862 = int_to_ptr.vmem [resolvable:$true] %s1861
      %1867 = dma.vmem_to_hbm [thread:$0]  %s1862, 4352, %s5, [#allocation3], 256, 256, 16
    $region25: #{tpu_custom_call.1} parent=1 // pred_fallthru
      _
    // Predicated region
    $region26: #{tpu_custom_call.1} parent=1 // pred_check
      _
    $region27: #{tpu_custom_call.1} parent=1 // pred_check_branch
      %1869 = sbr.rel (0) target = $region29
    $region28: #{tpu_custom_call.1} parent=1 // pred_region
      %1870 = dma.done [#allocation3], 4352
    $region29: #{tpu_custom_call.1} parent=1 // pred_fallthru
      _
    %1871 = vsyncpa [#allocation3], 1

</llo_original>
